<compile_context>
chip_gen: v7x
topology: tpu7x:2x2x1
jax: 0.10.0
libtpu: 0.0.40
codegen_flags: <defaults>
</compile_context>

<pallas_src>
import jax
import jax.numpy as jnp
from jax.experimental import pallas as pl
from jax.experimental.pallas import tpu as pltpu

LANE_PAD = 128  # lane-dense width for the N=1 final layer


def _round_up(n, m):
    return ((n + m - 1) // m) * m


def _cdiv(a, b):
    return (a + b - 1) // b


def discriminator_kernel(x_ref, w1_ref, b1_ref, w2_ref, b2_ref, w3_ref, b3_ref,
                         o_ref):
    # x arrives f32; cast to bf16 in-kernel (saves a separate XLA pad/cast pass).
    x = x_ref[...].astype(jnp.bfloat16)
    # fc1: bf16 MXU, f32 accumulation; bias+ReLU+bf16-cast fused (one VMEM pass).
    h1 = jnp.dot(x, w1_ref[...], preferred_element_type=jnp.float32)
    h1 = jnp.maximum(h1 + b1_ref[...], 0.0).astype(jnp.bfloat16)
    # fc2
    h2 = jnp.dot(h1, w2_ref[...], preferred_element_type=jnp.float32)
    h2 = jnp.maximum(h2 + b2_ref[...], 0.0).astype(jnp.bfloat16)
    # fc3 (lane-dense padded to 128 cols) + sigmoid, emitted as bf16.
    logits = jnp.dot(h2, w3_ref[...], preferred_element_type=jnp.float32)
    logits = logits + b3_ref[...]
    o_ref[...] = jax.nn.sigmoid(logits).astype(o_ref.dtype)


def prepare_params(params):
    """One-time weight prep (call once, reuse across forwards).

    bf16 w1/w2, f32 (1,hid) biases, and the N=1 final layer zero-padded to a
    lane-dense (hid, LANE_PAD) bf16 matrix / (1, LANE_PAD) f32 bias.
    """
    hid = params["w1"].shape[1]
    w3 = (jnp.zeros((hid, LANE_PAD), jnp.float32)
          .at[:, 0].set(params["w3"].reshape(hid))
          .astype(jnp.bfloat16))
    b3 = jnp.zeros((1, LANE_PAD), jnp.float32).at[0, 0].set(
        params["b3"].reshape(()))
    return dict(
        w1=params["w1"].astype(jnp.bfloat16),
        b1=params["b1"].reshape(1, hid).astype(jnp.float32),
        w2=params["w2"].astype(jnp.bfloat16),
        b2=params["b2"].reshape(1, hid).astype(jnp.float32),
        w3=w3,
        b3=b3,
    )


def _vmem_budget_bytes():
    """Per-generation VMEM budget for tile sizing (v7x has 64 MiB vs 128 MiB)."""
    try:
        kind = jax.devices()[0].device_kind.lower()
    except Exception:  # pragma: no cover - defensive; fall back to conservative budget
        kind = ""
    return (24 << 20) if "v7" in kind else (48 << 20)


def _per_row_vmem_bytes(inc, hid):
    # Bytes that scale with tile_b:
    #   x dbuf (f32) + out dbuf (bf16) + h1/h2 f32 + their bf16 copies + f32 logits.
    return (2 * inc * 4 + 2 * LANE_PAD * 2 + 2 * hid * (4 + 2) + LANE_PAD * 4)


def _fixed_vmem_bytes(inc, hid):
    # Resident (double-buffered) bf16 weights + f32 biases.
    return (2 * (inc * hid + hid * hid + hid * LANE_PAD) * 2
            + 2 * (2 * hid + LANE_PAD) * 4)


def _choose_tile_b(B, inc, hid, budget):
    per_row = _per_row_vmem_bytes(inc, hid)
    fixed = _fixed_vmem_bytes(inc, hid)
    cap = max(8, min(2048, ((budget - fixed) // per_row) // 8 * 8))
    Bp = _round_up(B, 8)
    if Bp <= cap:
        # Whole batch fits in one tile: split into 2 grid steps when possible so the
        # "parallel" axis feeds both TensorCores on v7x (neutral on v5e/v6e).
        if Bp >= 16:
            return _round_up(_cdiv(Bp, 2), 8)
        return Bp
    # Batch needs several tiles: pick the smallest k that respects the cap, which
    # keeps batch padding to < 8*k rows (avoids the near-2x round_up(B, tile) waste).
    k = _cdiv(Bp, cap)
    return _round_up(_cdiv(Bp, k), 8)


def discriminator_forward(x, prepped, *, tile_b=None):
    """x: (B, inc) float32. prepped: output of prepare_params()."""
    B, inc = x.shape
    hid = prepped["w1"].shape[1]
    assert inc % 128 == 0, "inc must be a multiple of 128 (lane dim)"
    assert hid % 128 == 0, "hid must be a multiple of 128 (lane dim)"

    budget = _vmem_budget_bytes()
    if tile_b is None:
        tile_b = _choose_tile_b(B, inc, hid, budget)
    assert tile_b % 8 == 0, "tile_b must be a multiple of 8 (f32 sublanes)"

    B_pad = _round_up(B, tile_b)
    x_p = x if B_pad == B else jnp.pad(x, ((0, B_pad - B), (0, 0)))
    grid = (B_pad // tile_b,)

    vmem_needed = _fixed_vmem_bytes(inc, hid) + _per_row_vmem_bytes(inc, hid) * tile_b
    vmem_limit = min(100 << 20, max(32 << 20, (vmem_needed * 3) // 2))

    flops = 2 * B_pad * (inc * hid + hid * hid + hid * LANE_PAD)
    bytes_accessed = (
        x_p.size * 4                                                    # f32 x read
        + (prepped["w1"].size + prepped["w2"].size + prepped["w3"].size) * 2  # bf16 weights
        + (prepped["b1"].size + prepped["b2"].size + prepped["b3"].size) * 4  # f32 biases
        + B_pad * LANE_PAD * 2)                                         # bf16 output

    out = pl.pallas_call(
        discriminator_kernel,
        out_shape=jax.ShapeDtypeStruct((B_pad, LANE_PAD), jnp.bfloat16),
        grid_spec=pltpu.PrefetchScalarGridSpec(
            num_scalar_prefetch=0,
            grid=grid,
            in_specs=[
                pl.BlockSpec((tile_b, inc),    lambda i: (i, 0)),  # x tile (f32)
                pl.BlockSpec((inc, hid),       lambda i: (0, 0)),  # w1 (resident bf16)
                pl.BlockSpec((1, hid),         lambda i: (0, 0)),  # b1 (f32)
                pl.BlockSpec((hid, hid),       lambda i: (0, 0)),  # w2 (resident bf16)
                pl.BlockSpec((1, hid),         lambda i: (0, 0)),  # b2 (f32)
                pl.BlockSpec((hid, LANE_PAD),  lambda i: (0, 0)),  # w3 padded (bf16)
                pl.BlockSpec((1, LANE_PAD),    lambda i: (0, 0)),  # b3 padded (f32)
            ],
            out_specs=pl.BlockSpec((tile_b, LANE_PAD), lambda i: (i, 0)),
        ),
        compiler_params=pltpu.CompilerParams(
            dimension_semantics=("parallel",),
            vmem_limit_bytes=int(vmem_limit)),
        cost_estimate=pl.CostEstimate(
            flops=flops,
            transcendentals=2 * B_pad * LANE_PAD,   # exp + recip per padded sigmoid elem
            bytes_accessed=bytes_accessed),
    )(x_p, prepped["w1"], prepped["b1"], prepped["w2"], prepped["b2"],
      prepped["w3"], prepped["b3"])

    # Only column 0 is valid; drop batch padding; return f32 like the PyTorch module.
    return out[:B, :1].astype(jnp.float32)


def init_params(key, inc, hid=512):
    """Deterministic synthetic init (uniform, PyTorch-Linear-like scaling)."""
    ks = jax.random.split(key, 6)

    def lin(kw, kb, fan_in, fan_out):
        bound = 1.0 / jnp.sqrt(fan_in)
        w = jax.random.uniform(kw, (fan_in, fan_out), jnp.float32, -bound, bound)
        b = jax.random.uniform(kb, (fan_out,), jnp.float32, -bound, bound)
        return w, b

    w1, b1 = lin(ks[0], ks[1], inc, hid)
    w2, b2 = lin(ks[2], ks[3], hid, hid)
    w3, b3 = lin(ks[4], ks[5], hid, 1)
    return dict(w1=w1, b1=b1, w2=w2, b2=b2, w3=w3, b3=b3)


def reference_forward(x, p):
    h1 = jax.nn.relu(x @ p["w1"] + p["b1"])
    h2 = jax.nn.relu(h1 @ p["w2"] + p["b2"])
    return jax.nn.sigmoid(h2 @ p["w3"] + p["b3"])


if __name__ == "__main__":
    # Small shapes consistent with the module: Discriminator(inc=256), batch=8.
    B, INC, HID = 8, 256, 512
    key = jax.random.PRNGKey(0)
    kx, kp = jax.random.split(key)
    x = jax.random.normal(kx, (B, INC), dtype=jnp.float32)
    params = init_params(kp, INC, HID)

    prepped = prepare_params(params)          # one-time weight prep (bf16 + padded fc3)
    fwd = jax.jit(discriminator_forward)      # pad/slice fuse with neighbors under jit

    out = jax.block_until_ready(fwd(x, prepped))
    ref = jax.block_until_ready(reference_forward(x, params))

    assert out.shape == (B, 1)
    # bf16 weights/activations (f32 MXU accumulation) + bf16 output -> loose tolerance.
    assert jnp.allclose(out, ref, atol=3e-2, rtol=3e-2), "mismatch vs reference"

    print("KERNEL_OK")
</pallas_src>

<mosaic_0001>
module attributes {stable_mosaic.version = 11 : i64} {
  func.func @discriminator_kernel(%arg0: i32, %arg1: memref<8x256xf32, #tpu.memory_space<vmem>>, %arg2: memref<256x512xbf16, #tpu.memory_space<vmem>>, %arg3: memref<1x512xf32, #tpu.memory_space<vmem>>, %arg4: memref<512x512xbf16, #tpu.memory_space<vmem>>, %arg5: memref<1x512xf32, #tpu.memory_space<vmem>>, %arg6: memref<512x128xbf16, #tpu.memory_space<vmem>>, %arg7: memref<1x128xf32, #tpu.memory_space<vmem>>, %arg8: memref<8x128xbf16, #tpu.memory_space<vmem>>) attributes {dimension_semantics = [#tpu.dimension_semantics<parallel>], iteration_bounds = array<i64: 1>, scalar_prefetch = 0 : i64, scratch_operands = 0 : i64, tpu.core_type = #tpu.core_type<tc>, window_params = [{transform_indices = @transform_0, window_bounds = array<i64: 8, 256>}, {pipeline_mode = #tpu.pipeline_mode<synchronous>, transform_indices = @transform_1, window_bounds = array<i64: 256, 512>}, {pipeline_mode = #tpu.pipeline_mode<synchronous>, transform_indices = @transform_2, window_bounds = array<i64: 1, 512>}, {pipeline_mode = #tpu.pipeline_mode<synchronous>, transform_indices = @transform_3, window_bounds = array<i64: 512, 512>}, {pipeline_mode = #tpu.pipeline_mode<synchronous>, transform_indices = @transform_4, window_bounds = array<i64: 1, 512>}, {pipeline_mode = #tpu.pipeline_mode<synchronous>, transform_indices = @transform_5, window_bounds = array<i64: 512, 128>}, {pipeline_mode = #tpu.pipeline_mode<synchronous>, transform_indices = @transform_6, window_bounds = array<i64: 1, 128>}, {transform_indices = @transform_7, window_bounds = array<i64: 8, 128>}]} {
    %c0 = arith.constant 0 : index
    %c0_0 = arith.constant 0 : index
    %0 = vector.load %arg1[%c0, %c0_0] : memref<8x256xf32, #tpu.memory_space<vmem>>, vector<8x256xf32>
    %1 = arith.truncf %0 : vector<8x256xf32> to vector<8x256xbf16>
    %c0_1 = arith.constant 0 : index
    %c0_2 = arith.constant 0 : index
    %2 = vector.load %arg2[%c0_1, %c0_2] : memref<256x512xbf16, #tpu.memory_space<vmem>>, vector<256x512xbf16>
    %cst = arith.constant dense<0.000000e+00> : vector<8x512xf32>
    %3 = tpu.matmul %1, %2, %cst {dimension_numbers = #tpu.dot_dimension_numbers<[1], [0], [0], [1], [0, 0, 1, 1], [], []>} : vector<8x256xbf16>, vector<256x512xbf16>, vector<8x512xf32> -> vector<8x512xf32>
    %c0_3 = arith.constant 0 : index
    %c0_4 = arith.constant 0 : index
    %4 = vector.load %arg3[%c0_3, %c0_4] : memref<1x512xf32, #tpu.memory_space<vmem>>, vector<1x512xf32>
    %5 = vector.broadcast %4 : vector<1x512xf32> to vector<8x512xf32>
    %6 = arith.addf %3, %5 : vector<8x512xf32>
    %cst_5 = arith.constant 0.000000e+00 : f32
    %7 = vector.broadcast %cst_5 : f32 to vector<8x512xf32>
    %8 = arith.maximumf %6, %7 : vector<8x512xf32>
    %9 = arith.truncf %8 : vector<8x512xf32> to vector<8x512xbf16>
    %c0_6 = arith.constant 0 : index
    %c0_7 = arith.constant 0 : index
    %10 = vector.load %arg4[%c0_6, %c0_7] : memref<512x512xbf16, #tpu.memory_space<vmem>>, vector<512x512xbf16>
    %cst_8 = arith.constant dense<0.000000e+00> : vector<8x512xf32>
    %11 = tpu.matmul %9, %10, %cst_8 {dimension_numbers = #tpu.dot_dimension_numbers<[1], [0], [0], [1], [0, 0, 1, 1], [], []>} : vector<8x512xbf16>, vector<512x512xbf16>, vector<8x512xf32> -> vector<8x512xf32>
    %c0_9 = arith.constant 0 : index
    %c0_10 = arith.constant 0 : index
    %12 = vector.load %arg5[%c0_9, %c0_10] : memref<1x512xf32, #tpu.memory_space<vmem>>, vector<1x512xf32>
    %13 = vector.broadcast %12 : vector<1x512xf32> to vector<8x512xf32>
    %14 = arith.addf %11, %13 : vector<8x512xf32>
    %cst_11 = arith.constant 0.000000e+00 : f32
    %15 = vector.broadcast %cst_11 : f32 to vector<8x512xf32>
    %16 = arith.maximumf %14, %15 : vector<8x512xf32>
    %17 = arith.truncf %16 : vector<8x512xf32> to vector<8x512xbf16>
    %c0_12 = arith.constant 0 : index
    %c0_13 = arith.constant 0 : index
    %18 = vector.load %arg6[%c0_12, %c0_13] : memref<512x128xbf16, #tpu.memory_space<vmem>>, vector<512x128xbf16>
    %cst_14 = arith.constant dense<0.000000e+00> : vector<8x128xf32>
    %19 = tpu.matmul %17, %18, %cst_14 {dimension_numbers = #tpu.dot_dimension_numbers<[1], [0], [0], [1], [0, 0, 1, 1], [], []>} : vector<8x512xbf16>, vector<512x128xbf16>, vector<8x128xf32> -> vector<8x128xf32>
    %c0_15 = arith.constant 0 : index
    %c0_16 = arith.constant 0 : index
    %20 = vector.load %arg7[%c0_15, %c0_16] : memref<1x128xf32, #tpu.memory_space<vmem>>, vector<1x128xf32>
    %21 = vector.broadcast %20 : vector<1x128xf32> to vector<8x128xf32>
    %22 = arith.addf %19, %21 : vector<8x128xf32>
    %23 = arith.negf %22 : vector<8x128xf32>
    %24 = math.exp %23 : vector<8x128xf32>
    %cst_17 = arith.constant 1.000000e+00 : f32
    %25 = vector.broadcast %cst_17 : f32 to vector<8x128xf32>
    %26 = arith.addf %25, %24 : vector<8x128xf32>
    %27 = arith.divf %25, %26 : vector<8x128xf32>
    %28 = arith.truncf %27 : vector<8x128xf32> to vector<8x128xbf16>
    %c0_18 = arith.constant 0 : index
    %c0_19 = arith.constant 0 : index
    %29 = vector.load %arg8[%c0_18, %c0_19] : memref<8x128xbf16, #tpu.memory_space<vmem>>, vector<8x128xbf16>
    tpu.vector_store %arg8[%c0_18, %c0_19], %28 {strides = array<i32>} : memref<8x128xbf16, #tpu.memory_space<vmem>>, vector<8x128xbf16>,
    return
  }
  func.func @transform_0(%arg0: i32) -> (i32, i32) {
    %c0_i32 = arith.constant 0 : i32
    %c0_i32_0 = arith.constant 0 : i32
    return %arg0, %c0_i32 : i32, i32
  }
  func.func @transform_1(%arg0: i32) -> (i32, i32) {
    %c0_i32 = arith.constant 0 : i32
    %c0_i32_0 = arith.constant 0 : i32
    %c0_i32_1 = arith.constant 0 : i32
    return %c0_i32, %c0_i32_0 : i32, i32
  }
  func.func @transform_2(%arg0: i32) -> (i32, i32) {
    %c0_i32 = arith.constant 0 : i32
    %c0_i32_0 = arith.constant 0 : i32
    %c0_i32_1 = arith.constant 0 : i32
    return %c0_i32, %c0_i32_0 : i32, i32
  }
  func.func @transform_3(%arg0: i32) -> (i32, i32) {
    %c0_i32 = arith.constant 0 : i32
    %c0_i32_0 = arith.constant 0 : i32
    %c0_i32_1 = arith.constant 0 : i32
    return %c0_i32, %c0_i32_0 : i32, i32
  }
  func.func @transform_4(%arg0: i32) -> (i32, i32) {
    %c0_i32 = arith.constant 0 : i32
    %c0_i32_0 = arith.constant 0 : i32
    %c0_i32_1 = arith.constant 0 : i32
    return %c0_i32, %c0_i32_0 : i32, i32
  }
  func.func @transform_5(%arg0: i32) -> (i32, i32) {
    %c0_i32 = arith.constant 0 : i32
    %c0_i32_0 = arith.constant 0 : i32
    %c0_i32_1 = arith.constant 0 : i32
    return %c0_i32, %c0_i32_0 : i32, i32
  }
  func.func @transform_6(%arg0: i32) -> (i32, i32) {
    %c0_i32 = arith.constant 0 : i32
    %c0_i32_0 = arith.constant 0 : i32
    %c0_i32_1 = arith.constant 0 : i32
    return %c0_i32, %c0_i32_0 : i32, i32
  }
  func.func @transform_7(%arg0: i32) -> (i32, i32) {
    %c0_i32 = arith.constant 0 : i32
    %c0_i32_0 = arith.constant 0 : i32
    return %arg0, %c0_i32 : i32, i32
  }
}

</mosaic_0001>

<llo_original>
// kernel: discriminator_forward.1
$region0: #{discriminator_forward.1}
  #allocation0 [shape = 'u32[]', space=smem, size = 0x4, offset = 0x4, fixed_abs, tag = 'smem constant byte address 0x4 - core index']
  #allocation1 [shape = 'u32[144,128]{1,0:T(1,128)}', space=vmem, size = 0x12000, scoped, tag = 'internal scratch']
  %s0 = inlined_call_operand.hbm [shape: f32[8,256], index: 0, kind: input, shape index: {}]
  %s1 = inlined_call_operand.hbm [shape: bf16[256,512], index: 1, kind: input, shape index: {}]
  %s2 = inlined_call_operand.hbm [shape: f32[1,512], index: 2, kind: input, shape index: {}]
  %s3 = inlined_call_operand.hbm [shape: bf16[512,512], index: 3, kind: input, shape index: {}]
  %s4 = inlined_call_operand.vmem [shape: f32[1,512], index: 4, kind: input, shape index: {}]
  %s5 = inlined_call_operand.hbm [shape: bf16[512,128], index: 5, kind: input, shape index: {}]
  %s6 = inlined_call_operand.vmem [shape: f32[1,128], index: 6, kind: input, shape index: {}]
  %s7 = inlined_call_operand.vmem [shape: bf16[8,128], index: 7, kind: output, shape index: {}]
  %s8 = sld [smem:[#allocation0]]
  $region58: #{discriminator_forward.1} parent=0
    _
  %s10 = ssub.s32 1, %s8
  %s11 = scalar_select 0, %s10, %s8
  $region1: #{discriminator_forward.1} parent=0
    #allocation2 [shape = 'u8[8192]{0}', space=vmem, size = 0x2000, scoped, tag = 'input window, operand 0, single buffered']
    #allocation3 [shape = 's32[1]{0}', space=sflag, size = 0x4, scoped, tag = 'scoped memory for discriminator_forward.1']
    #allocation4 [shape = 'u8[262144]{0}', space=vmem, size = 0x40000, scoped, tag = 'input window, operand 1, single buffered']
    #allocation5 [shape = 's32[1]{0}', space=sflag, size = 0x4, scoped, tag = 'scoped memory for discriminator_forward.1']
    #allocation6 [shape = 'u8[2048]{0}', space=vmem, size = 0x800, scoped, tag = 'input window, operand 2, single buffered']
    #allocation7 [shape = 'u8[524288]{0}', space=vmem, size = 0x80000, scoped, tag = 'input window, operand 3, single buffered']
    #allocation8 [shape = 's32[1]{0}', space=sflag, size = 0x4, scoped, tag = 'scoped memory for discriminator_forward.1']
    #allocation9 [shape = 'u8[131072]{0}', space=vmem, size = 0x20000, scoped, tag = 'input window, operand 5, single buffered']
    %12 = vsyncpa [#allocation3], 0
    %13 = vsyncpa [#allocation5], 0
    %14 = vsyncpa [#allocation8], 0
    // Predicated region
    $region2: #{discriminator_forward.1} parent=1 // pred_check
      _
    $region3: #{discriminator_forward.1} parent=1 // pred_check_branch
      %16 = sbr.rel (0) target = $region5
    $region4: #{discriminator_forward.1} parent=1 // pred_region
      %s18 = ssub.s32 256, 256
      %19 = vsyncadd [#allocation3], %s18
      %s21 = sshll.u32 [#allocation2], 4
      %s22 = int_to_ptr.vmem [resolvable:$true] %s21
      %24 = dma.hbm_to_vmem [thread:$0]  %s0, 256, %s22, [#allocation3]
    $region5: #{discriminator_forward.1} parent=1 // pred_fallthru
      _
    // Predicated region
    $region6: #{discriminator_forward.1} parent=1 // pred_check
      _
    $region7: #{discriminator_forward.1} parent=1 // pred_check_branch
      %26 = sbr.rel (0) target = $region9
    $region8: #{discriminator_forward.1} parent=1 // pred_region
      %s28 = ssub.s32 8192, 8192
      %29 = vsyncadd [#allocation5], %s28
      %s30 = sshll.u32 [#allocation4], 4
      %s31 = int_to_ptr.vmem [resolvable:$true] %s30
      %36 = dma.hbm_to_vmem [thread:$0]  %s1, 8192, %s31, [#allocation5], 256, 256, 16
    $region9: #{discriminator_forward.1} parent=1 // pred_fallthru
      _
    // Predicated region
    $region10: #{discriminator_forward.1} parent=1 // pred_check
      _
    $region11: #{discriminator_forward.1} parent=1 // pred_check_branch
      %38 = sbr.rel (0) target = $region13
    $region12: #{discriminator_forward.1} parent=1 // pred_region
      %s40 = ssub.s32 64, 64
      %41 = vsyncadd [#allocation5], %s40
      %s43 = sshll.u32 [#allocation6], 4
      %s44 = int_to_ptr.vmem [resolvable:$true] %s43
      %46 = dma.hbm_to_vmem [thread:$0]  %s2, 64, %s44, [#allocation5]
    $region13: #{discriminator_forward.1} parent=1 // pred_fallthru
      _
    // Predicated region
    $region14: #{discriminator_forward.1} parent=1 // pred_check
      _
    $region15: #{discriminator_forward.1} parent=1 // pred_check_branch
      %48 = sbr.rel (0) target = $region17
    $region16: #{discriminator_forward.1} parent=1 // pred_region
      %s50 = ssub.s32 16384, 16384
      %51 = vsyncadd [#allocation8], %s50
      %s52 = sshll.u32 [#allocation7], 4
      %s53 = int_to_ptr.vmem [resolvable:$true] %s52
      %58 = dma.hbm_to_vmem [thread:$0]  %s3, 16384, %s53, [#allocation8], 256, 256, 16
    $region17: #{discriminator_forward.1} parent=1 // pred_fallthru
      _
    // Predicated region
    $region18: #{discriminator_forward.1} parent=1 // pred_check
      _
    $region19: #{discriminator_forward.1} parent=1 // pred_check_branch
      %60 = sbr.rel (0) target = $region21
    $region20: #{discriminator_forward.1} parent=1 // pred_region
      _
    $region21: #{discriminator_forward.1} parent=1 // pred_fallthru
      _
    // Predicated region
    $region22: #{discriminator_forward.1} parent=1 // pred_check
      _
    $region23: #{discriminator_forward.1} parent=1 // pred_check_branch
      %62 = sbr.rel (0) target = $region25
    $region24: #{discriminator_forward.1} parent=1 // pred_region
      %s64 = ssub.s32 4096, 4096
      %65 = vsyncadd [#allocation8], %s64
      %s66 = sshll.u32 [#allocation9], 4
      %s67 = int_to_ptr.vmem [resolvable:$true] %s66
      %72 = dma.hbm_to_vmem [thread:$0]  %s5, 4096, %s67, [#allocation8], 64, 64, 4
    $region25: #{discriminator_forward.1} parent=1 // pred_fallthru
      _
    // Predicated region
    $region26: #{discriminator_forward.1} parent=1 // pred_check
      _
    $region27: #{discriminator_forward.1} parent=1 // pred_check_branch
      %74 = sbr.rel (0) target = $region29
    $region28: #{discriminator_forward.1} parent=1 // pred_region
      _
    $region29: #{discriminator_forward.1} parent=1 // pred_fallthru
      _
    // Predicated region
    $region30: #{discriminator_forward.1} parent=1 // pred_check
      _
    $region31: #{discriminator_forward.1} parent=1 // pred_check_branch
      %76 = sbr.rel (0) target = $region33
    $region32: #{discriminator_forward.1} parent=1 // pred_region
      %77 = dma.done [#allocation3], 256
    $region33: #{discriminator_forward.1} parent=1 // pred_fallthru
      _
    // Predicated region
    $region34: #{discriminator_forward.1} parent=1 // pred_check
      _
    $region35: #{discriminator_forward.1} parent=1 // pred_check_branch
      %79 = sbr.rel (0) target = $region37
    $region36: #{discriminator_forward.1} parent=1 // pred_region
      %80 = dma.done [#allocation5], 8192
    $region37: #{discriminator_forward.1} parent=1 // pred_fallthru
      _
    // Predicated region
    $region38: #{discriminator_forward.1} parent=1 // pred_check
      _
    $region39: #{discriminator_forward.1} parent=1 // pred_check_branch
      %82 = sbr.rel (0) target = $region41
    $region40: #{discriminator_forward.1} parent=1 // pred_region
      %83 = dma.done [#allocation5], 64
    $region41: #{discriminator_forward.1} parent=1 // pred_fallthru
      _
    // Predicated region
    $region42: #{discriminator_forward.1} parent=1 // pred_check
      _
    $region43: #{discriminator_forward.1} parent=1 // pred_check_branch
      %85 = sbr.rel (0) target = $region45
    $region44: #{discriminator_forward.1} parent=1 // pred_region
      %86 = dma.done [#allocation8], 16384
    $region45: #{discriminator_forward.1} parent=1 // pred_fallthru
      _
    // Predicated region
    $region46: #{discriminator_forward.1} parent=1 // pred_check
      _
    $region47: #{discriminator_forward.1} parent=1 // pred_check_branch
      %88 = sbr.rel (0) target = $region49
    $region48: #{discriminator_forward.1} parent=1 // pred_region
      %89 = dma.done [#allocation8], 4096
    $region49: #{discriminator_forward.1} parent=1 // pred_fallthru
      _
    %v91 = vld [vmem:[#allocation2] sm:$0xff]
    %v92 = vld [vmem:[#allocation2 + $0x8] sm:$0xff]
    %v93 = vpack.c.bf16 %v91, %v91
    %v94 = vpack.c.bf16 %v92, %v92
    %v95 = vld [vmem:[#allocation4] sm:$0xff]
    %v96 = vld [vmem:[#allocation4 + $0x8] sm:$0xff]
    %v97 = vld [vmem:[#allocation4 + $0x10] sm:$0xff]
    %v98 = vld [vmem:[#allocation4 + $0x18] sm:$0xff]
    %v99 = vld [vmem:[#allocation4 + $0x20] sm:$0xff]
    %v100 = vld [vmem:[#allocation4 + $0x28] sm:$0xff]
    %v101 = vld [vmem:[#allocation4 + $0x30] sm:$0xff]
    %v102 = vld [vmem:[#allocation4 + $0x38] sm:$0xff]
    %v103 = vld [vmem:[#allocation4 + $0x40] sm:$0xff]
    %v104 = vld [vmem:[#allocation4 + $0x48] sm:$0xff]
    %v105 = vld [vmem:[#allocation4 + $0x50] sm:$0xff]
    %v106 = vld [vmem:[#allocation4 + $0x58] sm:$0xff]
    %v107 = vld [vmem:[#allocation4 + $0x60] sm:$0xff]
    %v108 = vld [vmem:[#allocation4 + $0x68] sm:$0xff]
    %v109 = vld [vmem:[#allocation4 + $0x70] sm:$0xff]
    %v110 = vld [vmem:[#allocation4 + $0x78] sm:$0xff]
    %v111 = vld [vmem:[#allocation4 + $0x80] sm:$0xff]
    %v112 = vld [vmem:[#allocation4 + $0x88] sm:$0xff]
    %v113 = vld [vmem:[#allocation4 + $0x90] sm:$0xff]
    %v114 = vld [vmem:[#allocation4 + $0x98] sm:$0xff]
    %v115 = vld [vmem:[#allocation4 + $0xa0] sm:$0xff]
    %v116 = vld [vmem:[#allocation4 + $0xa8] sm:$0xff]
    %v117 = vld [vmem:[#allocation4 + $0xb0] sm:$0xff]
    %v118 = vld [vmem:[#allocation4 + $0xb8] sm:$0xff]
    %v119 = vld [vmem:[#allocation4 + $0xc0] sm:$0xff]
    %v120 = vld [vmem:[#allocation4 + $0xc8] sm:$0xff]
    %v121 = vld [vmem:[#allocation4 + $0xd0] sm:$0xff]
    %v122 = vld [vmem:[#allocation4 + $0xd8] sm:$0xff]
    %v123 = vld [vmem:[#allocation4 + $0xe0] sm:$0xff]
    %v124 = vld [vmem:[#allocation4 + $0xe8] sm:$0xff]
    %v125 = vld [vmem:[#allocation4 + $0xf0] sm:$0xff]
    %v126 = vld [vmem:[#allocation4 + $0xf8] sm:$0xff]
    %v127 = vld [vmem:[#allocation4 + $0x100] sm:$0xff]
    %v128 = vld [vmem:[#allocation4 + $0x108] sm:$0xff]
    %v129 = vld [vmem:[#allocation4 + $0x110] sm:$0xff]
    %v130 = vld [vmem:[#allocation4 + $0x118] sm:$0xff]
    %v131 = vld [vmem:[#allocation4 + $0x120] sm:$0xff]
    %v132 = vld [vmem:[#allocation4 + $0x128] sm:$0xff]
    %v133 = vld [vmem:[#allocation4 + $0x130] sm:$0xff]
    %v134 = vld [vmem:[#allocation4 + $0x138] sm:$0xff]
    %v135 = vld [vmem:[#allocation4 + $0x140] sm:$0xff]
    %v136 = vld [vmem:[#allocation4 + $0x148] sm:$0xff]
    %v137 = vld [vmem:[#allocation4 + $0x150] sm:$0xff]
    %v138 = vld [vmem:[#allocation4 + $0x158] sm:$0xff]
    %v139 = vld [vmem:[#allocation4 + $0x160] sm:$0xff]
    %v140 = vld [vmem:[#allocation4 + $0x168] sm:$0xff]
    %v141 = vld [vmem:[#allocation4 + $0x170] sm:$0xff]
    %v142 = vld [vmem:[#allocation4 + $0x178] sm:$0xff]
    %v143 = vld [vmem:[#allocation4 + $0x180] sm:$0xff]
    %v144 = vld [vmem:[#allocation4 + $0x188] sm:$0xff]
    %v145 = vld [vmem:[#allocation4 + $0x190] sm:$0xff]
    %v146 = vld [vmem:[#allocation4 + $0x198] sm:$0xff]
    %v147 = vld [vmem:[#allocation4 + $0x1a0] sm:$0xff]
    %v148 = vld [vmem:[#allocation4 + $0x1a8] sm:$0xff]
    %v149 = vld [vmem:[#allocation4 + $0x1b0] sm:$0xff]
    %v150 = vld [vmem:[#allocation4 + $0x1b8] sm:$0xff]
    %v151 = vld [vmem:[#allocation4 + $0x1c0] sm:$0xff]
    %v152 = vld [vmem:[#allocation4 + $0x1c8] sm:$0xff]
    %v153 = vld [vmem:[#allocation4 + $0x1d0] sm:$0xff]
    %v154 = vld [vmem:[#allocation4 + $0x1d8] sm:$0xff]
    %v155 = vld [vmem:[#allocation4 + $0x1e0] sm:$0xff]
    %v156 = vld [vmem:[#allocation4 + $0x1e8] sm:$0xff]
    %v157 = vld [vmem:[#allocation4 + $0x1f0] sm:$0xff]
    %v158 = vld [vmem:[#allocation4 + $0x1f8] sm:$0xff]
    %v159 = vld [vmem:[#allocation6] sm:$0xf]
    %v161 = vlaneseq
    %v162 = vshrl.u32 %v161, 7
    %v163 = vsub.s32 0, %v162
    %v164 = vrot.slane %v159, %v163
    %v165 = vlaneseq
    %v166 = vshrl.u32 %v165, 7
    %v167 = vsub.s32 1, %v166
    %v168 = vrot.slane %v159, %v167
    %v169 = vlaneseq
    %v170 = vshrl.u32 %v169, 7
    %v171 = vsub.s32 2, %v170
    %v172 = vrot.slane %v159, %v171
    %v173 = vlaneseq
    %v174 = vshrl.u32 %v173, 7
    %v175 = vsub.s32 3, %v174
    %v176 = vrot.slane %v159, %v175
    %v245 = vunpack.c.l.b16 %v95
    %v246 = vunpack.c.h.b16 %v95
    %v247 = vunpack.c.l.b16 %v96
    %v248 = vunpack.c.h.b16 %v96
    %v249 = vunpack.c.l.b16 %v97
    %v250 = vunpack.c.h.b16 %v97
    %v251 = vunpack.c.l.b16 %v98
    %v252 = vunpack.c.h.b16 %v98
    %v253 = vunpack.c.l.b16 %v99
    %v254 = vunpack.c.h.b16 %v99
    %v255 = vunpack.c.l.b16 %v100
    %v256 = vunpack.c.h.b16 %v100
    %v257 = vunpack.c.l.b16 %v101
    %v258 = vunpack.c.h.b16 %v101
    %v259 = vunpack.c.l.b16 %v102
    %v260 = vunpack.c.h.b16 %v102
    %v261 = vunpack.c.l.b16 %v103
    %v262 = vunpack.c.h.b16 %v103
    %v263 = vunpack.c.l.b16 %v104
    %v264 = vunpack.c.h.b16 %v104
    %v265 = vunpack.c.l.b16 %v105
    %v266 = vunpack.c.h.b16 %v105
    %v267 = vunpack.c.l.b16 %v106
    %v268 = vunpack.c.h.b16 %v106
    %v269 = vunpack.c.l.b16 %v107
    %v270 = vunpack.c.h.b16 %v107
    %v271 = vunpack.c.l.b16 %v108
    %v272 = vunpack.c.h.b16 %v108
    %v273 = vunpack.c.l.b16 %v109
    %v274 = vunpack.c.h.b16 %v109
    %v275 = vunpack.c.l.b16 %v110
    %v276 = vunpack.c.h.b16 %v110
    %v277 = vunpack.c.l.b16 %v111
    %v278 = vunpack.c.h.b16 %v111
    %v279 = vunpack.c.l.b16 %v112
    %v280 = vunpack.c.h.b16 %v112
    %v281 = vunpack.c.l.b16 %v113
    %v282 = vunpack.c.h.b16 %v113
    %v283 = vunpack.c.l.b16 %v114
    %v284 = vunpack.c.h.b16 %v114
    %v285 = vunpack.c.l.b16 %v115
    %v286 = vunpack.c.h.b16 %v115
    %v287 = vunpack.c.l.b16 %v116
    %v288 = vunpack.c.h.b16 %v116
    %v289 = vunpack.c.l.b16 %v117
    %v290 = vunpack.c.h.b16 %v117
    %v291 = vunpack.c.l.b16 %v118
    %v292 = vunpack.c.h.b16 %v118
    %v293 = vunpack.c.l.b16 %v119
    %v294 = vunpack.c.h.b16 %v119
    %v295 = vunpack.c.l.b16 %v120
    %v296 = vunpack.c.h.b16 %v120
    %v297 = vunpack.c.l.b16 %v121
    %v298 = vunpack.c.h.b16 %v121
    %v299 = vunpack.c.l.b16 %v122
    %v300 = vunpack.c.h.b16 %v122
    %v301 = vunpack.c.l.b16 %v123
    %v302 = vunpack.c.h.b16 %v123
    %v303 = vunpack.c.l.b16 %v124
    %v304 = vunpack.c.h.b16 %v124
    %v305 = vunpack.c.l.b16 %v125
    %v306 = vunpack.c.h.b16 %v125
    %v307 = vunpack.c.l.b16 %v126
    %v308 = vunpack.c.h.b16 %v126
    %v309 = vunpack.c.l.b16 %v127
    %v310 = vunpack.c.h.b16 %v127
    %v311 = vunpack.c.l.b16 %v128
    %v312 = vunpack.c.h.b16 %v128
    %v313 = vunpack.c.l.b16 %v129
    %v314 = vunpack.c.h.b16 %v129
    %v315 = vunpack.c.l.b16 %v130
    %v316 = vunpack.c.h.b16 %v130
    %v317 = vunpack.c.l.b16 %v131
    %v318 = vunpack.c.h.b16 %v131
    %v319 = vunpack.c.l.b16 %v132
    %v320 = vunpack.c.h.b16 %v132
    %v321 = vunpack.c.l.b16 %v133
    %v322 = vunpack.c.h.b16 %v133
    %v323 = vunpack.c.l.b16 %v134
    %v324 = vunpack.c.h.b16 %v134
    %v325 = vunpack.c.l.b16 %v135
    %v326 = vunpack.c.h.b16 %v135
    %v327 = vunpack.c.l.b16 %v136
    %v328 = vunpack.c.h.b16 %v136
    %v329 = vunpack.c.l.b16 %v137
    %v330 = vunpack.c.h.b16 %v137
    %v331 = vunpack.c.l.b16 %v138
    %v332 = vunpack.c.h.b16 %v138
    %v333 = vunpack.c.l.b16 %v139
    %v334 = vunpack.c.h.b16 %v139
    %v335 = vunpack.c.l.b16 %v140
    %v336 = vunpack.c.h.b16 %v140
    %v337 = vunpack.c.l.b16 %v141
    %v338 = vunpack.c.h.b16 %v141
    %v339 = vunpack.c.l.b16 %v142
    %v340 = vunpack.c.h.b16 %v142
    %v341 = vunpack.c.l.b16 %v143
    %v342 = vunpack.c.h.b16 %v143
    %v343 = vunpack.c.l.b16 %v144
    %v344 = vunpack.c.h.b16 %v144
    %v345 = vunpack.c.l.b16 %v145
    %v346 = vunpack.c.h.b16 %v145
    %v347 = vunpack.c.l.b16 %v146
    %v348 = vunpack.c.h.b16 %v146
    %v349 = vunpack.c.l.b16 %v147
    %v350 = vunpack.c.h.b16 %v147
    %v351 = vunpack.c.l.b16 %v148
    %v352 = vunpack.c.h.b16 %v148
    %v353 = vunpack.c.l.b16 %v149
    %v354 = vunpack.c.h.b16 %v149
    %v355 = vunpack.c.l.b16 %v150
    %v356 = vunpack.c.h.b16 %v150
    %v357 = vunpack.c.l.b16 %v151
    %v358 = vunpack.c.h.b16 %v151
    %v359 = vunpack.c.l.b16 %v152
    %v360 = vunpack.c.h.b16 %v152
    %v361 = vunpack.c.l.b16 %v153
    %v362 = vunpack.c.h.b16 %v153
    %v363 = vunpack.c.l.b16 %v154
    %v364 = vunpack.c.h.b16 %v154
    %v365 = vunpack.c.l.b16 %v155
    %v366 = vunpack.c.h.b16 %v155
    %v367 = vunpack.c.l.b16 %v156
    %v368 = vunpack.c.h.b16 %v156
    %v369 = vunpack.c.l.b16 %v157
    %v370 = vunpack.c.h.b16 %v157
    %v371 = vunpack.c.l.b16 %v158
    %v372 = vunpack.c.h.b16 %v158
    %v373 = vpack.c.b16 %v249, %v245
    %v374 = vpack.c.b16 %v250, %v246
    %v375 = vpack.c.b16 %v251, %v247
    %v376 = vpack.c.b16 %v252, %v248
    %v377 = vpack.c.b16 %v257, %v253
    %v378 = vpack.c.b16 %v258, %v254
    %v379 = vpack.c.b16 %v259, %v255
    %v380 = vpack.c.b16 %v260, %v256
    %v381 = vpack.c.b16 %v265, %v261
    %v382 = vpack.c.b16 %v266, %v262
    %v383 = vpack.c.b16 %v267, %v263
    %v384 = vpack.c.b16 %v268, %v264
    %v385 = vpack.c.b16 %v273, %v269
    %v386 = vpack.c.b16 %v274, %v270
    %v387 = vpack.c.b16 %v275, %v271
    %v388 = vpack.c.b16 %v276, %v272
    %v389 = vpack.c.b16 %v281, %v277
    %v390 = vpack.c.b16 %v282, %v278
    %v391 = vpack.c.b16 %v283, %v279
    %v392 = vpack.c.b16 %v284, %v280
    %v393 = vpack.c.b16 %v289, %v285
    %v394 = vpack.c.b16 %v290, %v286
    %v395 = vpack.c.b16 %v291, %v287
    %v396 = vpack.c.b16 %v292, %v288
    %v397 = vpack.c.b16 %v297, %v293
    %v398 = vpack.c.b16 %v298, %v294
    %v399 = vpack.c.b16 %v299, %v295
    %v400 = vpack.c.b16 %v300, %v296
    %v401 = vpack.c.b16 %v305, %v301
    %v402 = vpack.c.b16 %v306, %v302
    %v403 = vpack.c.b16 %v307, %v303
    %v404 = vpack.c.b16 %v308, %v304
    %v405 = vpack.c.b16 %v313, %v309
    %v406 = vpack.c.b16 %v314, %v310
    %v407 = vpack.c.b16 %v315, %v311
    %v408 = vpack.c.b16 %v316, %v312
    %v409 = vpack.c.b16 %v321, %v317
    %v410 = vpack.c.b16 %v322, %v318
    %v411 = vpack.c.b16 %v323, %v319
    %v412 = vpack.c.b16 %v324, %v320
    %v413 = vpack.c.b16 %v329, %v325
    %v414 = vpack.c.b16 %v330, %v326
    %v415 = vpack.c.b16 %v331, %v327
    %v416 = vpack.c.b16 %v332, %v328
    %v417 = vpack.c.b16 %v337, %v333
    %v418 = vpack.c.b16 %v338, %v334
    %v419 = vpack.c.b16 %v339, %v335
    %v420 = vpack.c.b16 %v340, %v336
    %v421 = vpack.c.b16 %v345, %v341
    %v422 = vpack.c.b16 %v346, %v342
    %v423 = vpack.c.b16 %v347, %v343
    %v424 = vpack.c.b16 %v348, %v344
    %v425 = vpack.c.b16 %v353, %v349
    %v426 = vpack.c.b16 %v354, %v350
    %v427 = vpack.c.b16 %v355, %v351
    %v428 = vpack.c.b16 %v356, %v352
    %v429 = vpack.c.b16 %v361, %v357
    %v430 = vpack.c.b16 %v362, %v358
    %v431 = vpack.c.b16 %v363, %v359
    %v432 = vpack.c.b16 %v364, %v360
    %v433 = vpack.c.b16 %v369, %v365
    %v434 = vpack.c.b16 %v370, %v366
    %v435 = vpack.c.b16 %v371, %v367
    %v436 = vpack.c.b16 %v372, %v368
    %501 = vmatprep.subr.bf16.mxu0 %v374
    %502 = vmatpush1.bf16.msra.mxu0 %v373
    %503 = vmatprep.subr.bf16.mxu0 %v378
    %504 = vmatpush1.bf16.msra.mxu0 %v377
    %505 = vmatprep.subr.bf16.mxu0 %v382
    %506 = vmatpush1.bf16.msra.mxu0 %v381
    %507 = vmatprep.subr.bf16.mxu0 %v386
    %508 = vmatpush1.bf16.msra.mxu0 %v385
    %509 = vmatprep.subr.bf16.mxu0 %v390
    %510 = vmatpush1.bf16.msra.mxu0 %v389
    %511 = vmatprep.subr.bf16.mxu0 %v394
    %512 = vmatpush1.bf16.msra.mxu0 %v393
    %513 = vmatprep.subr.bf16.mxu0 %v398
    %514 = vmatpush1.bf16.msra.mxu0 %v397
    %515 = vmatprep.subr.bf16.mxu0 %v402
    %516 = vmatpush1.bf16.msra.mxu0 %v401
    %517 = vmatprep.subr.bf16.mxu0 %v406
    %518 = vmatpush1.bf16.msra.mxu0 %v405
    %519 = vmatprep.subr.bf16.mxu0 %v410
    %520 = vmatpush1.bf16.msra.mxu0 %v409
    %521 = vmatprep.subr.bf16.mxu0 %v414
    %522 = vmatpush1.bf16.msra.mxu0 %v413
    %523 = vmatprep.subr.bf16.mxu0 %v418
    %524 = vmatpush1.bf16.msra.mxu0 %v417
    %525 = vmatprep.subr.bf16.mxu0 %v422
    %526 = vmatpush1.bf16.msra.mxu0 %v421
    %527 = vmatprep.subr.bf16.mxu0 %v426
    %528 = vmatpush1.bf16.msra.mxu0 %v425
    %529 = vmatprep.subr.bf16.mxu0 %v430
    %530 = vmatpush1.bf16.msra.mxu0 %v429
    %531 = vmatprep.subr.bf16.mxu0 %v434
    %532 = vmatpush1.bf16.msra.mxu0 %v433
    %533 = vmatprep.mubr.bf16.mxu0 %v94
    %534 = vmatmul.mubr.bf16.gmra.mrb[0].mxu0 %v93
    %v535 = vpop.f32.mrb[0].mxu0
    %v536 = vadd.f32 %v164, %v535
    %v537 = vpop.f32.mrb[0].mxu0
    %v538 = vadd.f32 %v168, %v537
    %v539 = vpop.f32.mrb[0].mxu0
    %v540 = vpop.f32.mrb[0].mxu0
    %541 = vdwg.mxu0
    %542 = vmatprep.subr.bf16.mxu0 %v376
    %543 = vmatpush1.bf16.msra.mxu0 %v375
    %544 = vmatprep.subr.bf16.mxu0 %v380
    %545 = vmatpush1.bf16.msra.mxu0 %v379
    %546 = vmatprep.subr.bf16.mxu0 %v384
    %547 = vmatpush1.bf16.msra.mxu0 %v383
    %548 = vmatprep.subr.bf16.mxu0 %v388
    %549 = vmatpush1.bf16.msra.mxu0 %v387
    %550 = vmatprep.subr.bf16.mxu0 %v392
    %551 = vmatpush1.bf16.msra.mxu0 %v391
    %552 = vmatprep.subr.bf16.mxu0 %v396
    %553 = vmatpush1.bf16.msra.mxu0 %v395
    %554 = vmatprep.subr.bf16.mxu0 %v400
    %555 = vmatpush1.bf16.msra.mxu0 %v399
    %556 = vmatprep.subr.bf16.mxu0 %v404
    %557 = vmatpush1.bf16.msra.mxu0 %v403
    %558 = vmatprep.subr.bf16.mxu0 %v408
    %559 = vmatpush1.bf16.msra.mxu0 %v407
    %560 = vmatprep.subr.bf16.mxu0 %v412
    %561 = vmatpush1.bf16.msra.mxu0 %v411
    %562 = vmatprep.subr.bf16.mxu0 %v416
    %563 = vmatpush1.bf16.msra.mxu0 %v415
    %564 = vmatprep.subr.bf16.mxu0 %v420
    %565 = vmatpush1.bf16.msra.mxu0 %v419
    %566 = vmatprep.subr.bf16.mxu0 %v424
    %567 = vmatpush1.bf16.msra.mxu0 %v423
    %568 = vmatprep.subr.bf16.mxu0 %v428
    %569 = vmatpush1.bf16.msra.mxu0 %v427
    %570 = vmatprep.subr.bf16.mxu0 %v432
    %571 = vmatpush1.bf16.msra.mxu0 %v431
    %572 = vmatprep.subr.bf16.mxu0 %v436
    %573 = vmatpush1.bf16.msra.mxu0 %v435
    %574 = vmatprep.mubr.bf16.mxu0 %v94
    %575 = vmatmul.mubr.bf16.gmra.mrb[0].mxu0 %v93
    %v576 = vpop.f32.mrb[0].mxu0
    %v577 = vadd.f32 %v172, %v576
    %v578 = vpop.f32.mrb[0].mxu0
    %v579 = vadd.f32 %v176, %v578
    %v580 = vpop.f32.mrb[0].mxu0
    %v581 = vpop.f32.mrb[0].mxu0
    %582 = vdwg.mxu0
    %v583 = vmax.f32 %v536, 0.0
    %v584 = vmax.f32 %v538, 0.0
    %v585 = vmax.f32 %v577, 0.0
    %v586 = vmax.f32 %v579, 0.0
    %v587 = vpack.c.bf16 %v583, %v583
    %v588 = vpack.c.bf16 %v584, %v584
    %v589 = vpack.c.bf16 %v585, %v585
    %v590 = vpack.c.bf16 %v586, %v586
    %v591 = vld [vmem:[#allocation7] sm:$0xff]
    %v592 = vld [vmem:[#allocation7 + $0x8] sm:$0xff]
    %v593 = vld [vmem:[#allocation7 + $0x10] sm:$0xff]
    %v594 = vld [vmem:[#allocation7 + $0x18] sm:$0xff]
    %v595 = vld [vmem:[#allocation7 + $0x20] sm:$0xff]
    %v596 = vld [vmem:[#allocation7 + $0x28] sm:$0xff]
    %v597 = vld [vmem:[#allocation7 + $0x30] sm:$0xff]
    %v598 = vld [vmem:[#allocation7 + $0x38] sm:$0xff]
    %v599 = vld [vmem:[#allocation7 + $0x40] sm:$0xff]
    %v600 = vld [vmem:[#allocation7 + $0x48] sm:$0xff]
    %v601 = vld [vmem:[#allocation7 + $0x50] sm:$0xff]
    %v602 = vld [vmem:[#allocation7 + $0x58] sm:$0xff]
    %v603 = vld [vmem:[#allocation7 + $0x60] sm:$0xff]
    %v604 = vld [vmem:[#allocation7 + $0x68] sm:$0xff]
    %v605 = vld [vmem:[#allocation7 + $0x70] sm:$0xff]
    %v606 = vld [vmem:[#allocation7 + $0x78] sm:$0xff]
    %v607 = vld [vmem:[#allocation7 + $0x80] sm:$0xff]
    %v608 = vld [vmem:[#allocation7 + $0x88] sm:$0xff]
    %v609 = vld [vmem:[#allocation7 + $0x90] sm:$0xff]
    %v610 = vld [vmem:[#allocation7 + $0x98] sm:$0xff]
    %v611 = vld [vmem:[#allocation7 + $0xa0] sm:$0xff]
    %v612 = vld [vmem:[#allocation7 + $0xa8] sm:$0xff]
    %v613 = vld [vmem:[#allocation7 + $0xb0] sm:$0xff]
    %v614 = vld [vmem:[#allocation7 + $0xb8] sm:$0xff]
    %v615 = vld [vmem:[#allocation7 + $0xc0] sm:$0xff]
    %v616 = vld [vmem:[#allocation7 + $0xc8] sm:$0xff]
    %v617 = vld [vmem:[#allocation7 + $0xd0] sm:$0xff]
    %v618 = vld [vmem:[#allocation7 + $0xd8] sm:$0xff]
    %v619 = vld [vmem:[#allocation7 + $0xe0] sm:$0xff]
    %v620 = vld [vmem:[#allocation7 + $0xe8] sm:$0xff]
    %v621 = vld [vmem:[#allocation7 + $0xf0] sm:$0xff]
    %v622 = vld [vmem:[#allocation7 + $0xf8] sm:$0xff]
    %v623 = vld [vmem:[#allocation7 + $0x100] sm:$0xff]
    %v624 = vld [vmem:[#allocation7 + $0x108] sm:$0xff]
    %v625 = vld [vmem:[#allocation7 + $0x110] sm:$0xff]
    %v626 = vld [vmem:[#allocation7 + $0x118] sm:$0xff]
    %v627 = vld [vmem:[#allocation7 + $0x120] sm:$0xff]
    %v628 = vld [vmem:[#allocation7 + $0x128] sm:$0xff]
    %v629 = vld [vmem:[#allocation7 + $0x130] sm:$0xff]
    %v630 = vld [vmem:[#allocation7 + $0x138] sm:$0xff]
    %v631 = vld [vmem:[#allocation7 + $0x140] sm:$0xff]
    %v632 = vld [vmem:[#allocation7 + $0x148] sm:$0xff]
    %v633 = vld [vmem:[#allocation7 + $0x150] sm:$0xff]
    %v634 = vld [vmem:[#allocation7 + $0x158] sm:$0xff]
    %v635 = vld [vmem:[#allocation7 + $0x160] sm:$0xff]
    %v636 = vld [vmem:[#allocation7 + $0x168] sm:$0xff]
    %v637 = vld [vmem:[#allocation7 + $0x170] sm:$0xff]
    %v638 = vld [vmem:[#allocation7 + $0x178] sm:$0xff]
    %v639 = vld [vmem:[#allocation7 + $0x180] sm:$0xff]
    %v640 = vld [vmem:[#allocation7 + $0x188] sm:$0xff]
    %v641 = vld [vmem:[#allocation7 + $0x190] sm:$0xff]
    %v642 = vld [vmem:[#allocation7 + $0x198] sm:$0xff]
    %v643 = vld [vmem:[#allocation7 + $0x1a0] sm:$0xff]
    %v644 = vld [vmem:[#allocation7 + $0x1a8] sm:$0xff]
    %v645 = vld [vmem:[#allocation7 + $0x1b0] sm:$0xff]
    %v646 = vld [vmem:[#allocation7 + $0x1b8] sm:$0xff]
    %v647 = vld [vmem:[#allocation7 + $0x1c0] sm:$0xff]
    %v648 = vld [vmem:[#allocation7 + $0x1c8] sm:$0xff]
    %v649 = vld [vmem:[#allocation7 + $0x1d0] sm:$0xff]
    %v650 = vld [vmem:[#allocation7 + $0x1d8] sm:$0xff]
    %v651 = vld [vmem:[#allocation7 + $0x1e0] sm:$0xff]
    %v652 = vld [vmem:[#allocation7 + $0x1e8] sm:$0xff]
    %v653 = vld [vmem:[#allocation7 + $0x1f0] sm:$0xff]
    %v654 = vld [vmem:[#allocation7 + $0x1f8] sm:$0xff]
    %v655 = vld [vmem:[#allocation7 + $0x200] sm:$0xff]
    %v656 = vld [vmem:[#allocation7 + $0x208] sm:$0xff]
    %v657 = vld [vmem:[#allocation7 + $0x210] sm:$0xff]
    %v658 = vld [vmem:[#allocation7 + $0x218] sm:$0xff]
    %v659 = vld [vmem:[#allocation7 + $0x220] sm:$0xff]
    %v660 = vld [vmem:[#allocation7 + $0x228] sm:$0xff]
    %v661 = vld [vmem:[#allocation7 + $0x230] sm:$0xff]
    %v662 = vld [vmem:[#allocation7 + $0x238] sm:$0xff]
    %v663 = vld [vmem:[#allocation7 + $0x240] sm:$0xff]
    %v664 = vld [vmem:[#allocation7 + $0x248] sm:$0xff]
    %v665 = vld [vmem:[#allocation7 + $0x250] sm:$0xff]
    %v666 = vld [vmem:[#allocation7 + $0x258] sm:$0xff]
    %v667 = vld [vmem:[#allocation7 + $0x260] sm:$0xff]
    %v668 = vld [vmem:[#allocation7 + $0x268] sm:$0xff]
    %v669 = vld [vmem:[#allocation7 + $0x270] sm:$0xff]
    %v670 = vld [vmem:[#allocation7 + $0x278] sm:$0xff]
    %v671 = vld [vmem:[#allocation7 + $0x280] sm:$0xff]
    %v672 = vld [vmem:[#allocation7 + $0x288] sm:$0xff]
    %v673 = vld [vmem:[#allocation7 + $0x290] sm:$0xff]
    %v674 = vld [vmem:[#allocation7 + $0x298] sm:$0xff]
    %v675 = vld [vmem:[#allocation7 + $0x2a0] sm:$0xff]
    %v676 = vld [vmem:[#allocation7 + $0x2a8] sm:$0xff]
    %v677 = vld [vmem:[#allocation7 + $0x2b0] sm:$0xff]
    %v678 = vld [vmem:[#allocation7 + $0x2b8] sm:$0xff]
    %v679 = vld [vmem:[#allocation7 + $0x2c0] sm:$0xff]
    %v680 = vld [vmem:[#allocation7 + $0x2c8] sm:$0xff]
    %v681 = vld [vmem:[#allocation7 + $0x2d0] sm:$0xff]
    %v682 = vld [vmem:[#allocation7 + $0x2d8] sm:$0xff]
    %v683 = vld [vmem:[#allocation7 + $0x2e0] sm:$0xff]
    %v684 = vld [vmem:[#allocation7 + $0x2e8] sm:$0xff]
    %v685 = vld [vmem:[#allocation7 + $0x2f0] sm:$0xff]
    %v686 = vld [vmem:[#allocation7 + $0x2f8] sm:$0xff]
    %v687 = vld [vmem:[#allocation7 + $0x300] sm:$0xff]
    %v688 = vld [vmem:[#allocation7 + $0x308] sm:$0xff]
    %v689 = vld [vmem:[#allocation7 + $0x310] sm:$0xff]
    %v690 = vld [vmem:[#allocation7 + $0x318] sm:$0xff]
    %v691 = vld [vmem:[#allocation7 + $0x320] sm:$0xff]
    %v692 = vld [vmem:[#allocation7 + $0x328] sm:$0xff]
    %v693 = vld [vmem:[#allocation7 + $0x330] sm:$0xff]
    %v694 = vld [vmem:[#allocation7 + $0x338] sm:$0xff]
    %v695 = vld [vmem:[#allocation7 + $0x340] sm:$0xff]
    %v696 = vld [vmem:[#allocation7 + $0x348] sm:$0xff]
    %v697 = vld [vmem:[#allocation7 + $0x350] sm:$0xff]
    %v698 = vld [vmem:[#allocation7 + $0x358] sm:$0xff]
    %v699 = vld [vmem:[#allocation7 + $0x360] sm:$0xff]
    %v700 = vld [vmem:[#allocation7 + $0x368] sm:$0xff]
    %v701 = vld [vmem:[#allocation7 + $0x370] sm:$0xff]
    %v702 = vld [vmem:[#allocation7 + $0x378] sm:$0xff]
    %v703 = vld [vmem:[#allocation7 + $0x380] sm:$0xff]
    %v704 = vld [vmem:[#allocation7 + $0x388] sm:$0xff]
    %v705 = vld [vmem:[#allocation7 + $0x390] sm:$0xff]
    %v706 = vld [vmem:[#allocation7 + $0x398] sm:$0xff]
    %v707 = vld [vmem:[#allocation7 + $0x3a0] sm:$0xff]
    %v708 = vld [vmem:[#allocation7 + $0x3a8] sm:$0xff]
    %v709 = vld [vmem:[#allocation7 + $0x3b0] sm:$0xff]
    %v710 = vld [vmem:[#allocation7 + $0x3b8] sm:$0xff]
    %v711 = vld [vmem:[#allocation7 + $0x3c0] sm:$0xff]
    %v712 = vld [vmem:[#allocation7 + $0x3c8] sm:$0xff]
    %v713 = vld [vmem:[#allocation7 + $0x3d0] sm:$0xff]
    %v714 = vld [vmem:[#allocation7 + $0x3d8] sm:$0xff]
    %v715 = vld [vmem:[#allocation7 + $0x3e0] sm:$0xff]
    %v716 = vld [vmem:[#allocation7 + $0x3e8] sm:$0xff]
    %v717 = vld [vmem:[#allocation7 + $0x3f0] sm:$0xff]
    %v718 = vld [vmem:[#allocation7 + $0x3f8] sm:$0xff]
    %v719 = vld [vmem:[%s4] sm:$0xf]
    %v721 = vlaneseq
    %v722 = vshrl.u32 %v721, 7
    %v723 = vsub.s32 0, %v722
    %v724 = vrot.slane %v719, %v723
    %v725 = vlaneseq
    %v726 = vshrl.u32 %v725, 7
    %v727 = vsub.s32 1, %v726
    %v728 = vrot.slane %v719, %v727
    %v729 = vlaneseq
    %v730 = vshrl.u32 %v729, 7
    %v731 = vsub.s32 2, %v730
    %v732 = vrot.slane %v719, %v731
    %v733 = vlaneseq
    %v734 = vshrl.u32 %v733, 7
    %v735 = vsub.s32 3, %v734
    %v736 = vrot.slane %v719, %v735
    %v869 = vunpack.c.l.b16 %v591
    %v870 = vunpack.c.h.b16 %v591
    %v871 = vunpack.c.l.b16 %v592
    %v872 = vunpack.c.h.b16 %v592
    %v873 = vunpack.c.l.b16 %v593
    %v874 = vunpack.c.h.b16 %v593
    %v875 = vunpack.c.l.b16 %v594
    %v876 = vunpack.c.h.b16 %v594
    %v877 = vunpack.c.l.b16 %v595
    %v878 = vunpack.c.h.b16 %v595
    %v879 = vunpack.c.l.b16 %v596
    %v880 = vunpack.c.h.b16 %v596
    %v881 = vunpack.c.l.b16 %v597
    %v882 = vunpack.c.h.b16 %v597
    %v883 = vunpack.c.l.b16 %v598
    %v884 = vunpack.c.h.b16 %v598
    %v885 = vunpack.c.l.b16 %v599
    %v886 = vunpack.c.h.b16 %v599
    %v887 = vunpack.c.l.b16 %v600
    %v888 = vunpack.c.h.b16 %v600
    %v889 = vunpack.c.l.b16 %v601
    %v890 = vunpack.c.h.b16 %v601
    %v891 = vunpack.c.l.b16 %v602
    %v892 = vunpack.c.h.b16 %v602
    %v893 = vunpack.c.l.b16 %v603
    %v894 = vunpack.c.h.b16 %v603
    %v895 = vunpack.c.l.b16 %v604
    %v896 = vunpack.c.h.b16 %v604
    %v897 = vunpack.c.l.b16 %v605
    %v898 = vunpack.c.h.b16 %v605
    %v899 = vunpack.c.l.b16 %v606
    %v900 = vunpack.c.h.b16 %v606
    %v901 = vunpack.c.l.b16 %v607
    %v902 = vunpack.c.h.b16 %v607
    %v903 = vunpack.c.l.b16 %v608
    %v904 = vunpack.c.h.b16 %v608
    %v905 = vunpack.c.l.b16 %v609
    %v906 = vunpack.c.h.b16 %v609
    %v907 = vunpack.c.l.b16 %v610
    %v908 = vunpack.c.h.b16 %v610
    %v909 = vunpack.c.l.b16 %v611
    %v910 = vunpack.c.h.b16 %v611
    %v911 = vunpack.c.l.b16 %v612
    %v912 = vunpack.c.h.b16 %v612
    %v913 = vunpack.c.l.b16 %v613
    %v914 = vunpack.c.h.b16 %v613
    %v915 = vunpack.c.l.b16 %v614
    %v916 = vunpack.c.h.b16 %v614
    %v917 = vunpack.c.l.b16 %v615
    %v918 = vunpack.c.h.b16 %v615
    %v919 = vunpack.c.l.b16 %v616
    %v920 = vunpack.c.h.b16 %v616
    %v921 = vunpack.c.l.b16 %v617
    %v922 = vunpack.c.h.b16 %v617
    %v923 = vunpack.c.l.b16 %v618
    %v924 = vunpack.c.h.b16 %v618
    %v925 = vunpack.c.l.b16 %v619
    %v926 = vunpack.c.h.b16 %v619
    %v927 = vunpack.c.l.b16 %v620
    %v928 = vunpack.c.h.b16 %v620
    %v929 = vunpack.c.l.b16 %v621
    %v930 = vunpack.c.h.b16 %v621
    %v931 = vunpack.c.l.b16 %v622
    %v932 = vunpack.c.h.b16 %v622
    %v933 = vunpack.c.l.b16 %v623
    %v934 = vunpack.c.h.b16 %v623
    %v935 = vunpack.c.l.b16 %v624
    %v936 = vunpack.c.h.b16 %v624
    %v937 = vunpack.c.l.b16 %v625
    %v938 = vunpack.c.h.b16 %v625
    %v939 = vunpack.c.l.b16 %v626
    %v940 = vunpack.c.h.b16 %v626
    %v941 = vunpack.c.l.b16 %v627
    %v942 = vunpack.c.h.b16 %v627
    %v943 = vunpack.c.l.b16 %v628
    %v944 = vunpack.c.h.b16 %v628
    %v945 = vunpack.c.l.b16 %v629
    %v946 = vunpack.c.h.b16 %v629
    %v947 = vunpack.c.l.b16 %v630
    %v948 = vunpack.c.h.b16 %v630
    %v949 = vunpack.c.l.b16 %v631
    %v950 = vunpack.c.h.b16 %v631
    %v951 = vunpack.c.l.b16 %v632
    %v952 = vunpack.c.h.b16 %v632
    %v953 = vunpack.c.l.b16 %v633
    %v954 = vunpack.c.h.b16 %v633
    %v955 = vunpack.c.l.b16 %v634
    %v956 = vunpack.c.h.b16 %v634
    %v957 = vunpack.c.l.b16 %v635
    %v958 = vunpack.c.h.b16 %v635
    %v959 = vunpack.c.l.b16 %v636
    %v960 = vunpack.c.h.b16 %v636
    %v961 = vunpack.c.l.b16 %v637
    %v962 = vunpack.c.h.b16 %v637
    %v963 = vunpack.c.l.b16 %v638
    %v964 = vunpack.c.h.b16 %v638
    %v965 = vunpack.c.l.b16 %v639
    %v966 = vunpack.c.h.b16 %v639
    %v967 = vunpack.c.l.b16 %v640
    %v968 = vunpack.c.h.b16 %v640
    %v969 = vunpack.c.l.b16 %v641
    %v970 = vunpack.c.h.b16 %v641
    %v971 = vunpack.c.l.b16 %v642
    %v972 = vunpack.c.h.b16 %v642
    %v973 = vunpack.c.l.b16 %v643
    %v974 = vunpack.c.h.b16 %v643
    %v975 = vunpack.c.l.b16 %v644
    %v976 = vunpack.c.h.b16 %v644
    %v977 = vunpack.c.l.b16 %v645
    %v978 = vunpack.c.h.b16 %v645
    %v979 = vunpack.c.l.b16 %v646
    %v980 = vunpack.c.h.b16 %v646
    %v981 = vunpack.c.l.b16 %v647
    %v982 = vunpack.c.h.b16 %v647
    %v983 = vunpack.c.l.b16 %v648
    %v984 = vunpack.c.h.b16 %v648
    %v985 = vunpack.c.l.b16 %v649
    %v986 = vunpack.c.h.b16 %v649
    %v987 = vunpack.c.l.b16 %v650
    %v988 = vunpack.c.h.b16 %v650
    %v989 = vunpack.c.l.b16 %v651
    %v990 = vunpack.c.h.b16 %v651
    %v991 = vunpack.c.l.b16 %v652
    %v992 = vunpack.c.h.b16 %v652
    %v993 = vunpack.c.l.b16 %v653
    %v994 = vunpack.c.h.b16 %v653
    %v995 = vunpack.c.l.b16 %v654
    %v996 = vunpack.c.h.b16 %v654
    %v997 = vunpack.c.l.b16 %v655
    %v998 = vunpack.c.h.b16 %v655
    %v999 = vunpack.c.l.b16 %v656
    %v1000 = vunpack.c.h.b16 %v656
    %v1001 = vunpack.c.l.b16 %v657
    %v1002 = vunpack.c.h.b16 %v657
    %v1003 = vunpack.c.l.b16 %v658
    %v1004 = vunpack.c.h.b16 %v658
    %v1005 = vunpack.c.l.b16 %v659
    %v1006 = vunpack.c.h.b16 %v659
    %v1007 = vunpack.c.l.b16 %v660
    %v1008 = vunpack.c.h.b16 %v660
    %v1009 = vunpack.c.l.b16 %v661
    %v1010 = vunpack.c.h.b16 %v661
    %v1011 = vunpack.c.l.b16 %v662
    %v1012 = vunpack.c.h.b16 %v662
    %v1013 = vunpack.c.l.b16 %v663
    %v1014 = vunpack.c.h.b16 %v663
    %v1015 = vunpack.c.l.b16 %v664
    %v1016 = vunpack.c.h.b16 %v664
    %v1017 = vunpack.c.l.b16 %v665
    %v1018 = vunpack.c.h.b16 %v665
    %v1019 = vunpack.c.l.b16 %v666
    %v1020 = vunpack.c.h.b16 %v666
    %v1021 = vunpack.c.l.b16 %v667
    %v1022 = vunpack.c.h.b16 %v667
    %v1023 = vunpack.c.l.b16 %v668
    %v1024 = vunpack.c.h.b16 %v668
    %v1025 = vunpack.c.l.b16 %v669
    %v1026 = vunpack.c.h.b16 %v669
    %v1027 = vunpack.c.l.b16 %v670
    %v1028 = vunpack.c.h.b16 %v670
    %v1029 = vunpack.c.l.b16 %v671
    %v1030 = vunpack.c.h.b16 %v671
    %v1031 = vunpack.c.l.b16 %v672
    %v1032 = vunpack.c.h.b16 %v672
    %v1033 = vunpack.c.l.b16 %v673
    %v1034 = vunpack.c.h.b16 %v673
    %v1035 = vunpack.c.l.b16 %v674
    %v1036 = vunpack.c.h.b16 %v674
    %v1037 = vunpack.c.l.b16 %v675
    %v1038 = vunpack.c.h.b16 %v675
    %v1039 = vunpack.c.l.b16 %v676
    %v1040 = vunpack.c.h.b16 %v676
    %v1041 = vunpack.c.l.b16 %v677
    %v1042 = vunpack.c.h.b16 %v677
    %v1043 = vunpack.c.l.b16 %v678
    %v1044 = vunpack.c.h.b16 %v678
    %v1045 = vunpack.c.l.b16 %v679
    %v1046 = vunpack.c.h.b16 %v679
    %v1047 = vunpack.c.l.b16 %v680
    %v1048 = vunpack.c.h.b16 %v680
    %v1049 = vunpack.c.l.b16 %v681
    %v1050 = vunpack.c.h.b16 %v681
    %v1051 = vunpack.c.l.b16 %v682
    %v1052 = vunpack.c.h.b16 %v682
    %v1053 = vunpack.c.l.b16 %v683
    %v1054 = vunpack.c.h.b16 %v683
    %v1055 = vunpack.c.l.b16 %v684
    %v1056 = vunpack.c.h.b16 %v684
    %v1057 = vunpack.c.l.b16 %v685
    %v1058 = vunpack.c.h.b16 %v685
    %v1059 = vunpack.c.l.b16 %v686
    %v1060 = vunpack.c.h.b16 %v686
    %v1061 = vunpack.c.l.b16 %v687
    %v1062 = vunpack.c.h.b16 %v687
    %v1063 = vunpack.c.l.b16 %v688
    %v1064 = vunpack.c.h.b16 %v688
    %v1065 = vunpack.c.l.b16 %v689
    %v1066 = vunpack.c.h.b16 %v689
    %v1067 = vunpack.c.l.b16 %v690
    %v1068 = vunpack.c.h.b16 %v690
    %v1069 = vunpack.c.l.b16 %v691
    %v1070 = vunpack.c.h.b16 %v691
    %v1071 = vunpack.c.l.b16 %v692
    %v1072 = vunpack.c.h.b16 %v692
    %v1073 = vunpack.c.l.b16 %v693
    %v1074 = vunpack.c.h.b16 %v693
    %v1075 = vunpack.c.l.b16 %v694
    %v1076 = vunpack.c.h.b16 %v694
    %v1077 = vunpack.c.l.b16 %v695
    %v1078 = vunpack.c.h.b16 %v695
    %v1079 = vunpack.c.l.b16 %v696
    %v1080 = vunpack.c.h.b16 %v696
    %v1081 = vunpack.c.l.b16 %v697
    %v1082 = vunpack.c.h.b16 %v697
    %v1083 = vunpack.c.l.b16 %v698
    %v1084 = vunpack.c.h.b16 %v698
    %v1085 = vunpack.c.l.b16 %v699
    %v1086 = vunpack.c.h.b16 %v699
    %v1087 = vunpack.c.l.b16 %v700
    %v1088 = vunpack.c.h.b16 %v700
    %v1089 = vunpack.c.l.b16 %v701
    %v1090 = vunpack.c.h.b16 %v701
    %v1091 = vunpack.c.l.b16 %v702
    %v1092 = vunpack.c.h.b16 %v702
    %v1093 = vunpack.c.l.b16 %v703
    %v1094 = vunpack.c.h.b16 %v703
    %v1095 = vunpack.c.l.b16 %v704
    %v1096 = vunpack.c.h.b16 %v704
    %v1097 = vunpack.c.l.b16 %v705
    %v1098 = vunpack.c.h.b16 %v705
    %v1099 = vunpack.c.l.b16 %v706
    %v1100 = vunpack.c.h.b16 %v706
    %v1101 = vunpack.c.l.b16 %v707
    %v1102 = vunpack.c.h.b16 %v707
    %v1103 = vunpack.c.l.b16 %v708
    %v1104 = vunpack.c.h.b16 %v708
    %v1105 = vunpack.c.l.b16 %v709
    %v1106 = vunpack.c.h.b16 %v709
    %v1107 = vunpack.c.l.b16 %v710
    %v1108 = vunpack.c.h.b16 %v710
    %v1109 = vunpack.c.l.b16 %v711
    %v1110 = vunpack.c.h.b16 %v711
    %v1111 = vunpack.c.l.b16 %v712
    %v1112 = vunpack.c.h.b16 %v712
    %v1113 = vunpack.c.l.b16 %v713
    %v1114 = vunpack.c.h.b16 %v713
    %v1115 = vunpack.c.l.b16 %v714
    %v1116 = vunpack.c.h.b16 %v714
    %v1117 = vunpack.c.l.b16 %v715
    %v1118 = vunpack.c.h.b16 %v715
    %v1119 = vunpack.c.l.b16 %v716
    %v1120 = vunpack.c.h.b16 %v716
    %v1121 = vunpack.c.l.b16 %v717
    %v1122 = vunpack.c.h.b16 %v717
    %v1123 = vunpack.c.l.b16 %v718
    %v1124 = vunpack.c.h.b16 %v718
    %v1125 = vpack.c.b16 %v873, %v869
    %v1126 = vpack.c.b16 %v874, %v870
    %v1127 = vpack.c.b16 %v875, %v871
    %v1128 = vpack.c.b16 %v876, %v872
    %v1129 = vpack.c.b16 %v881, %v877
    %v1130 = vpack.c.b16 %v882, %v878
    %v1131 = vpack.c.b16 %v883, %v879
    %v1132 = vpack.c.b16 %v884, %v880
    %v1133 = vpack.c.b16 %v889, %v885
    %v1134 = vpack.c.b16 %v890, %v886
    %v1135 = vpack.c.b16 %v891, %v887
    %v1136 = vpack.c.b16 %v892, %v888
    %v1137 = vpack.c.b16 %v897, %v893
    %v1138 = vpack.c.b16 %v898, %v894
    %v1139 = vpack.c.b16 %v899, %v895
    %v1140 = vpack.c.b16 %v900, %v896
    %v1141 = vpack.c.b16 %v905, %v901
    %v1142 = vpack.c.b16 %v906, %v902
    %v1143 = vpack.c.b16 %v907, %v903
    %v1144 = vpack.c.b16 %v908, %v904
    %v1145 = vpack.c.b16 %v913, %v909
    %v1146 = vpack.c.b16 %v914, %v910
    %v1147 = vpack.c.b16 %v915, %v911
    %v1148 = vpack.c.b16 %v916, %v912
    %v1149 = vpack.c.b16 %v921, %v917
    %v1150 = vpack.c.b16 %v922, %v918
    %v1151 = vpack.c.b16 %v923, %v919
    %v1152 = vpack.c.b16 %v924, %v920
    %v1153 = vpack.c.b16 %v929, %v925
    %v1154 = vpack.c.b16 %v930, %v926
    %v1155 = vpack.c.b16 %v931, %v927
    %v1156 = vpack.c.b16 %v932, %v928
    %v1157 = vpack.c.b16 %v937, %v933
    %v1158 = vpack.c.b16 %v938, %v934
    %v1159 = vpack.c.b16 %v939, %v935
    %v1160 = vpack.c.b16 %v940, %v936
    %v1161 = vpack.c.b16 %v945, %v941
    %v1162 = vpack.c.b16 %v946, %v942
    %v1163 = vpack.c.b16 %v947, %v943
    %v1164 = vpack.c.b16 %v948, %v944
    %v1165 = vpack.c.b16 %v953, %v949
    %v1166 = vpack.c.b16 %v954, %v950
    %v1167 = vpack.c.b16 %v955, %v951
    %v1168 = vpack.c.b16 %v956, %v952
    %v1169 = vpack.c.b16 %v961, %v957
    %v1170 = vpack.c.b16 %v962, %v958
    %v1171 = vpack.c.b16 %v963, %v959
    %v1172 = vpack.c.b16 %v964, %v960
    %v1173 = vpack.c.b16 %v969, %v965
    %v1174 = vpack.c.b16 %v970, %v966
    %v1175 = vpack.c.b16 %v971, %v967
    %v1176 = vpack.c.b16 %v972, %v968
    %v1177 = vpack.c.b16 %v977, %v973
    %v1178 = vpack.c.b16 %v978, %v974
    %v1179 = vpack.c.b16 %v979, %v975
    %v1180 = vpack.c.b16 %v980, %v976
    %v1181 = vpack.c.b16 %v985, %v981
    %v1182 = vpack.c.b16 %v986, %v982
    %v1183 = vpack.c.b16 %v987, %v983
    %v1184 = vpack.c.b16 %v988, %v984
    %v1185 = vpack.c.b16 %v993, %v989
    %v1186 = vpack.c.b16 %v994, %v990
    %v1187 = vpack.c.b16 %v995, %v991
    %v1188 = vpack.c.b16 %v996, %v992
    %v1189 = vpack.c.b16 %v1001, %v997
    %v1190 = vpack.c.b16 %v1002, %v998
    %v1191 = vpack.c.b16 %v1003, %v999
    %v1192 = vpack.c.b16 %v1004, %v1000
    %v1193 = vpack.c.b16 %v1009, %v1005
    %v1194 = vpack.c.b16 %v1010, %v1006
    %v1195 = vpack.c.b16 %v1011, %v1007
    %v1196 = vpack.c.b16 %v1012, %v1008
    %v1197 = vpack.c.b16 %v1017, %v1013
    %v1198 = vpack.c.b16 %v1018, %v1014
    %v1199 = vpack.c.b16 %v1019, %v1015
    %v1200 = vpack.c.b16 %v1020, %v1016
    %v1201 = vpack.c.b16 %v1025, %v1021
    %v1202 = vpack.c.b16 %v1026, %v1022
    %v1203 = vpack.c.b16 %v1027, %v1023
    %v1204 = vpack.c.b16 %v1028, %v1024
    %v1205 = vpack.c.b16 %v1033, %v1029
    %v1206 = vpack.c.b16 %v1034, %v1030
    %v1207 = vpack.c.b16 %v1035, %v1031
    %v1208 = vpack.c.b16 %v1036, %v1032
    %v1209 = vpack.c.b16 %v1041, %v1037
    %v1210 = vpack.c.b16 %v1042, %v1038
    %v1211 = vpack.c.b16 %v1043, %v1039
    %v1212 = vpack.c.b16 %v1044, %v1040
    %v1213 = vpack.c.b16 %v1049, %v1045
    %v1214 = vpack.c.b16 %v1050, %v1046
    %v1215 = vpack.c.b16 %v1051, %v1047
    %v1216 = vpack.c.b16 %v1052, %v1048
    %v1217 = vpack.c.b16 %v1057, %v1053
    %v1218 = vpack.c.b16 %v1058, %v1054
    %v1219 = vpack.c.b16 %v1059, %v1055
    %v1220 = vpack.c.b16 %v1060, %v1056
    %v1221 = vpack.c.b16 %v1065, %v1061
    %v1222 = vpack.c.b16 %v1066, %v1062
    %v1223 = vpack.c.b16 %v1067, %v1063
    %v1224 = vpack.c.b16 %v1068, %v1064
    %v1225 = vpack.c.b16 %v1073, %v1069
    %v1226 = vpack.c.b16 %v1074, %v1070
    %v1227 = vpack.c.b16 %v1075, %v1071
    %v1228 = vpack.c.b16 %v1076, %v1072
    %v1229 = vpack.c.b16 %v1081, %v1077
    %v1230 = vpack.c.b16 %v1082, %v1078
    %v1231 = vpack.c.b16 %v1083, %v1079
    %v1232 = vpack.c.b16 %v1084, %v1080
    %v1233 = vpack.c.b16 %v1089, %v1085
    %v1234 = vpack.c.b16 %v1090, %v1086
    %v1235 = vpack.c.b16 %v1091, %v1087
    %v1236 = vpack.c.b16 %v1092, %v1088
    %v1237 = vpack.c.b16 %v1097, %v1093
    %v1238 = vpack.c.b16 %v1098, %v1094
    %v1239 = vpack.c.b16 %v1099, %v1095
    %v1240 = vpack.c.b16 %v1100, %v1096
    %v1241 = vpack.c.b16 %v1105, %v1101
    %v1242 = vpack.c.b16 %v1106, %v1102
    %v1243 = vpack.c.b16 %v1107, %v1103
    %v1244 = vpack.c.b16 %v1108, %v1104
    %v1245 = vpack.c.b16 %v1113, %v1109
    %v1246 = vpack.c.b16 %v1114, %v1110
    %v1247 = vpack.c.b16 %v1115, %v1111
    %v1248 = vpack.c.b16 %v1116, %v1112
    %v1249 = vpack.c.b16 %v1121, %v1117
    %v1250 = vpack.c.b16 %v1122, %v1118
    %v1251 = vpack.c.b16 %v1123, %v1119
    %v1252 = vpack.c.b16 %v1124, %v1120
    %1381 = vmatprep.subr.bf16.mxu0 %v1126
    %1382 = vmatpush1.bf16.msra.mxu0 %v1125
    %1383 = vmatprep.subr.bf16.mxu0 %v1130
    %1384 = vmatpush1.bf16.msra.mxu0 %v1129
    %1385 = vmatprep.subr.bf16.mxu0 %v1134
    %1386 = vmatpush1.bf16.msra.mxu0 %v1133
    %1387 = vmatprep.subr.bf16.mxu0 %v1138
    %1388 = vmatpush1.bf16.msra.mxu0 %v1137
    %1389 = vmatprep.subr.bf16.mxu0 %v1142
    %1390 = vmatpush1.bf16.msra.mxu0 %v1141
    %1391 = vmatprep.subr.bf16.mxu0 %v1146
    %1392 = vmatpush1.bf16.msra.mxu0 %v1145
    %1393 = vmatprep.subr.bf16.mxu0 %v1150
    %1394 = vmatpush1.bf16.msra.mxu0 %v1149
    %1395 = vmatprep.subr.bf16.mxu0 %v1154
    %1396 = vmatpush1.bf16.msra.mxu0 %v1153
    %1397 = vmatprep.subr.bf16.mxu0 %v1158
    %1398 = vmatpush1.bf16.msra.mxu0 %v1157
    %1399 = vmatprep.subr.bf16.mxu0 %v1162
    %1400 = vmatpush1.bf16.msra.mxu0 %v1161
    %1401 = vmatprep.subr.bf16.mxu0 %v1166
    %1402 = vmatpush1.bf16.msra.mxu0 %v1165
    %1403 = vmatprep.subr.bf16.mxu0 %v1170
    %1404 = vmatpush1.bf16.msra.mxu0 %v1169
    %1405 = vmatprep.subr.bf16.mxu0 %v1174
    %1406 = vmatpush1.bf16.msra.mxu0 %v1173
    %1407 = vmatprep.subr.bf16.mxu0 %v1178
    %1408 = vmatpush1.bf16.msra.mxu0 %v1177
    %1409 = vmatprep.subr.bf16.mxu0 %v1182
    %1410 = vmatpush1.bf16.msra.mxu0 %v1181
    %1411 = vmatprep.subr.bf16.mxu0 %v1186
    %1412 = vmatpush1.bf16.msra.mxu0 %v1185
    %1413 = vmatprep.mubr.bf16.mxu0 %v588
    %1414 = vmatmul.mubr.bf16.gmra.mrb[0].mxu0 %v587
    %v1415 = vpop.f32.mrb[0].mxu0
    %v1416 = vadd.f32 %v724, %v1415
    %v1417 = vpop.f32.mrb[0].mxu0
    %v1418 = vadd.f32 %v728, %v1417
    %v1419 = vpop.f32.mrb[0].mxu0
    %v1420 = vpop.f32.mrb[0].mxu0
    %1421 = vdwg.mxu0
    %1422 = vmatprep.subr.bf16.mxu0 %v1190
    %1423 = vmatpush1.bf16.msra.mxu0 %v1189
    %1424 = vmatprep.subr.bf16.mxu0 %v1194
    %1425 = vmatpush1.bf16.msra.mxu0 %v1193
    %1426 = vmatprep.subr.bf16.mxu0 %v1198
    %1427 = vmatpush1.bf16.msra.mxu0 %v1197
    %1428 = vmatprep.subr.bf16.mxu0 %v1202
    %1429 = vmatpush1.bf16.msra.mxu0 %v1201
    %1430 = vmatprep.subr.bf16.mxu0 %v1206
    %1431 = vmatpush1.bf16.msra.mxu0 %v1205
    %1432 = vmatprep.subr.bf16.mxu0 %v1210
    %1433 = vmatpush1.bf16.msra.mxu0 %v1209
    %1434 = vmatprep.subr.bf16.mxu0 %v1214
    %1435 = vmatpush1.bf16.msra.mxu0 %v1213
    %1436 = vmatprep.subr.bf16.mxu0 %v1218
    %1437 = vmatpush1.bf16.msra.mxu0 %v1217
    %1438 = vmatprep.subr.bf16.mxu0 %v1222
    %1439 = vmatpush1.bf16.msra.mxu0 %v1221
    %1440 = vmatprep.subr.bf16.mxu0 %v1226
    %1441 = vmatpush1.bf16.msra.mxu0 %v1225
    %1442 = vmatprep.subr.bf16.mxu0 %v1230
    %1443 = vmatpush1.bf16.msra.mxu0 %v1229
    %1444 = vmatprep.subr.bf16.mxu0 %v1234
    %1445 = vmatpush1.bf16.msra.mxu0 %v1233
    %1446 = vmatprep.subr.bf16.mxu0 %v1238
    %1447 = vmatpush1.bf16.msra.mxu0 %v1237
    %1448 = vmatprep.subr.bf16.mxu0 %v1242
    %1449 = vmatpush1.bf16.msra.mxu0 %v1241
    %1450 = vmatprep.subr.bf16.mxu0 %v1246
    %1451 = vmatpush1.bf16.msra.mxu0 %v1245
    %1452 = vmatprep.subr.bf16.mxu0 %v1250
    %1453 = vmatpush1.bf16.msra.mxu0 %v1249
    %1454 = vmatprep.mubr.bf16.mxu0 %v590
    %1455 = vmatmul.mubr.bf16.gmra.mrb[0].mxu0 %v589
    %v1456 = vpop.f32.mrb[0].mxu0
    %v1457 = vadd.f32 %v1416, %v1456
    %v1458 = vpop.f32.mrb[0].mxu0
    %v1459 = vadd.f32 %v1418, %v1458
    %v1460 = vpop.f32.mrb[0].mxu0
    %v1461 = vpop.f32.mrb[0].mxu0
    %1462 = vdwg.mxu0
    %1463 = vmatprep.subr.bf16.mxu0 %v1128
    %1464 = vmatpush1.bf16.msra.mxu0 %v1127
    %1465 = vmatprep.subr.bf16.mxu0 %v1132
    %1466 = vmatpush1.bf16.msra.mxu0 %v1131
    %1467 = vmatprep.subr.bf16.mxu0 %v1136
    %1468 = vmatpush1.bf16.msra.mxu0 %v1135
    %1469 = vmatprep.subr.bf16.mxu0 %v1140
    %1470 = vmatpush1.bf16.msra.mxu0 %v1139
    %1471 = vmatprep.subr.bf16.mxu0 %v1144
    %1472 = vmatpush1.bf16.msra.mxu0 %v1143
    %1473 = vmatprep.subr.bf16.mxu0 %v1148
    %1474 = vmatpush1.bf16.msra.mxu0 %v1147
    %1475 = vmatprep.subr.bf16.mxu0 %v1152
    %1476 = vmatpush1.bf16.msra.mxu0 %v1151
    %1477 = vmatprep.subr.bf16.mxu0 %v1156
    %1478 = vmatpush1.bf16.msra.mxu0 %v1155
    %1479 = vmatprep.subr.bf16.mxu0 %v1160
    %1480 = vmatpush1.bf16.msra.mxu0 %v1159
    %1481 = vmatprep.subr.bf16.mxu0 %v1164
    %1482 = vmatpush1.bf16.msra.mxu0 %v1163
    %1483 = vmatprep.subr.bf16.mxu0 %v1168
    %1484 = vmatpush1.bf16.msra.mxu0 %v1167
    %1485 = vmatprep.subr.bf16.mxu0 %v1172
    %1486 = vmatpush1.bf16.msra.mxu0 %v1171
    %1487 = vmatprep.subr.bf16.mxu0 %v1176
    %1488 = vmatpush1.bf16.msra.mxu0 %v1175
    %1489 = vmatprep.subr.bf16.mxu0 %v1180
    %1490 = vmatpush1.bf16.msra.mxu0 %v1179
    %1491 = vmatprep.subr.bf16.mxu0 %v1184
    %1492 = vmatpush1.bf16.msra.mxu0 %v1183
    %1493 = vmatprep.subr.bf16.mxu0 %v1188
    %1494 = vmatpush1.bf16.msra.mxu0 %v1187
    %1495 = vmatprep.mubr.bf16.mxu0 %v588
    %1496 = vmatmul.mubr.bf16.gmra.mrb[0].mxu0 %v587
    %v1497 = vpop.f32.mrb[0].mxu0
    %v1498 = vadd.f32 %v732, %v1497
    %v1499 = vpop.f32.mrb[0].mxu0
    %v1500 = vadd.f32 %v736, %v1499
    %v1501 = vpop.f32.mrb[0].mxu0
    %v1502 = vpop.f32.mrb[0].mxu0
    %1503 = vdwg.mxu0
    %1504 = vmatprep.subr.bf16.mxu0 %v1192
    %1505 = vmatpush1.bf16.msra.mxu0 %v1191
    %1506 = vmatprep.subr.bf16.mxu0 %v1196
    %1507 = vmatpush1.bf16.msra.mxu0 %v1195
    %1508 = vmatprep.subr.bf16.mxu0 %v1200
    %1509 = vmatpush1.bf16.msra.mxu0 %v1199
    %1510 = vmatprep.subr.bf16.mxu0 %v1204
    %1511 = vmatpush1.bf16.msra.mxu0 %v1203
    %1512 = vmatprep.subr.bf16.mxu0 %v1208
    %1513 = vmatpush1.bf16.msra.mxu0 %v1207
    %1514 = vmatprep.subr.bf16.mxu0 %v1212
    %1515 = vmatpush1.bf16.msra.mxu0 %v1211
    %1516 = vmatprep.subr.bf16.mxu0 %v1216
    %1517 = vmatpush1.bf16.msra.mxu0 %v1215
    %1518 = vmatprep.subr.bf16.mxu0 %v1220
    %1519 = vmatpush1.bf16.msra.mxu0 %v1219
    %1520 = vmatprep.subr.bf16.mxu0 %v1224
    %1521 = vmatpush1.bf16.msra.mxu0 %v1223
    %1522 = vmatprep.subr.bf16.mxu0 %v1228
    %1523 = vmatpush1.bf16.msra.mxu0 %v1227
    %1524 = vmatprep.subr.bf16.mxu0 %v1232
    %1525 = vmatpush1.bf16.msra.mxu0 %v1231
    %1526 = vmatprep.subr.bf16.mxu0 %v1236
    %1527 = vmatpush1.bf16.msra.mxu0 %v1235
    %1528 = vmatprep.subr.bf16.mxu0 %v1240
    %1529 = vmatpush1.bf16.msra.mxu0 %v1239
    %1530 = vmatprep.subr.bf16.mxu0 %v1244
    %1531 = vmatpush1.bf16.msra.mxu0 %v1243
    %1532 = vmatprep.subr.bf16.mxu0 %v1248
    %1533 = vmatpush1.bf16.msra.mxu0 %v1247
    %1534 = vmatprep.subr.bf16.mxu0 %v1252
    %1535 = vmatpush1.bf16.msra.mxu0 %v1251
    %1536 = vmatprep.mubr.bf16.mxu0 %v590
    %1537 = vmatmul.mubr.bf16.gmra.mrb[0].mxu0 %v589
    %v1538 = vpop.f32.mrb[0].mxu0
    %v1539 = vadd.f32 %v1498, %v1538
    %v1540 = vpop.f32.mrb[0].mxu0
    %v1541 = vadd.f32 %v1500, %v1540
    %v1542 = vpop.f32.mrb[0].mxu0
    %v1543 = vpop.f32.mrb[0].mxu0
    %1544 = vdwg.mxu0
    %v1545 = vmax.f32 %v1457, 0.0
    %v1546 = vmax.f32 %v1459, 0.0
    %v1547 = vmax.f32 %v1539, 0.0
    %v1548 = vmax.f32 %v1541, 0.0
    %v1549 = vpack.c.bf16 %v1545, %v1545
    %v1550 = vpack.c.bf16 %v1546, %v1546
    %v1551 = vpack.c.bf16 %v1547, %v1547
    %v1552 = vpack.c.bf16 %v1548, %v1548
    %v1553 = vld [vmem:[#allocation9] sm:$0xf]
    %v1554 = vld [vmem:[#allocation9 + $0x4] sm:$0xf]
    %v1555 = vld [vmem:[#allocation9 + $0x8] sm:$0xf]
    %v1556 = vld [vmem:[#allocation9 + $0xc] sm:$0xf]
    %v1557 = vld [vmem:[#allocation9 + $0x10] sm:$0xf]
    %v1558 = vld [vmem:[#allocation9 + $0x14] sm:$0xf]
    %v1559 = vld [vmem:[#allocation9 + $0x18] sm:$0xf]
    %v1560 = vld [vmem:[#allocation9 + $0x1c] sm:$0xf]
    %v1561 = vld [vmem:[#allocation9 + $0x20] sm:$0xf]
    %v1562 = vld [vmem:[#allocation9 + $0x24] sm:$0xf]
    %v1563 = vld [vmem:[#allocation9 + $0x28] sm:$0xf]
    %v1564 = vld [vmem:[#allocation9 + $0x2c] sm:$0xf]
    %v1565 = vld [vmem:[#allocation9 + $0x30] sm:$0xf]
    %v1566 = vld [vmem:[#allocation9 + $0x34] sm:$0xf]
    %v1567 = vld [vmem:[#allocation9 + $0x38] sm:$0xf]
    %v1568 = vld [vmem:[#allocation9 + $0x3c] sm:$0xf]
    %v1569 = vld [vmem:[#allocation9 + $0x40] sm:$0xf]
    %v1570 = vld [vmem:[#allocation9 + $0x44] sm:$0xf]
    %v1571 = vld [vmem:[#allocation9 + $0x48] sm:$0xf]
    %v1572 = vld [vmem:[#allocation9 + $0x4c] sm:$0xf]
    %v1573 = vld [vmem:[#allocation9 + $0x50] sm:$0xf]
    %v1574 = vld [vmem:[#allocation9 + $0x54] sm:$0xf]
    %v1575 = vld [vmem:[#allocation9 + $0x58] sm:$0xf]
    %v1576 = vld [vmem:[#allocation9 + $0x5c] sm:$0xf]
    %v1577 = vld [vmem:[#allocation9 + $0x60] sm:$0xf]
    %v1578 = vld [vmem:[#allocation9 + $0x64] sm:$0xf]
    %v1579 = vld [vmem:[#allocation9 + $0x68] sm:$0xf]
    %v1580 = vld [vmem:[#allocation9 + $0x6c] sm:$0xf]
    %v1581 = vld [vmem:[#allocation9 + $0x70] sm:$0xf]
    %v1582 = vld [vmem:[#allocation9 + $0x74] sm:$0xf]
    %v1583 = vld [vmem:[#allocation9 + $0x78] sm:$0xf]
    %v1584 = vld [vmem:[#allocation9 + $0x7c] sm:$0xf]
    %v1585 = vld [vmem:[#allocation9 + $0x80] sm:$0xf]
    %v1586 = vld [vmem:[#allocation9 + $0x84] sm:$0xf]
    %v1587 = vld [vmem:[#allocation9 + $0x88] sm:$0xf]
    %v1588 = vld [vmem:[#allocation9 + $0x8c] sm:$0xf]
    %v1589 = vld [vmem:[#allocation9 + $0x90] sm:$0xf]
    %v1590 = vld [vmem:[#allocation9 + $0x94] sm:$0xf]
    %v1591 = vld [vmem:[#allocation9 + $0x98] sm:$0xf]
    %v1592 = vld [vmem:[#allocation9 + $0x9c] sm:$0xf]
    %v1593 = vld [vmem:[#allocation9 + $0xa0] sm:$0xf]
    %v1594 = vld [vmem:[#allocation9 + $0xa4] sm:$0xf]
    %v1595 = vld [vmem:[#allocation9 + $0xa8] sm:$0xf]
    %v1596 = vld [vmem:[#allocation9 + $0xac] sm:$0xf]
    %v1597 = vld [vmem:[#allocation9 + $0xb0] sm:$0xf]
    %v1598 = vld [vmem:[#allocation9 + $0xb4] sm:$0xf]
    %v1599 = vld [vmem:[#allocation9 + $0xb8] sm:$0xf]
    %v1600 = vld [vmem:[#allocation9 + $0xbc] sm:$0xf]
    %v1601 = vld [vmem:[#allocation9 + $0xc0] sm:$0xf]
    %v1602 = vld [vmem:[#allocation9 + $0xc4] sm:$0xf]
    %v1603 = vld [vmem:[#allocation9 + $0xc8] sm:$0xf]
    %v1604 = vld [vmem:[#allocation9 + $0xcc] sm:$0xf]
    %v1605 = vld [vmem:[#allocation9 + $0xd0] sm:$0xf]
    %v1606 = vld [vmem:[#allocation9 + $0xd4] sm:$0xf]
    %v1607 = vld [vmem:[#allocation9 + $0xd8] sm:$0xf]
    %v1608 = vld [vmem:[#allocation9 + $0xdc] sm:$0xf]
    %v1609 = vld [vmem:[#allocation9 + $0xe0] sm:$0xf]
    %v1610 = vld [vmem:[#allocation9 + $0xe4] sm:$0xf]
    %v1611 = vld [vmem:[#allocation9 + $0xe8] sm:$0xf]
    %v1612 = vld [vmem:[#allocation9 + $0xec] sm:$0xf]
    %v1613 = vld [vmem:[#allocation9 + $0xf0] sm:$0xf]
    %v1614 = vld [vmem:[#allocation9 + $0xf4] sm:$0xf]
    %v1615 = vld [vmem:[#allocation9 + $0xf8] sm:$0xf]
    %v1616 = vld [vmem:[#allocation9 + $0xfc] sm:$0xf]
    %v1617 = vld [vmem:[%s6] sm:$0x1]
    %v1619 = vlaneseq
    %v1620 = vshrl.u32 %v1619, 7
    %v1621 = vsub.s32 0, %v1620
    %v1622 = vrot.slane %v1617, %v1621
    %v1688 = vunpack.c.l.b16 %v1553
    %v1689 = vunpack.c.l.b16 %v1554
    %v1690 = vunpack.c.l.b16 %v1555
    %v1691 = vunpack.c.l.b16 %v1556
    %v1692 = vunpack.c.l.b16 %v1557
    %v1693 = vunpack.c.l.b16 %v1558
    %v1694 = vunpack.c.l.b16 %v1559
    %v1695 = vunpack.c.l.b16 %v1560
    %v1696 = vunpack.c.l.b16 %v1561
    %v1697 = vunpack.c.l.b16 %v1562
    %v1698 = vunpack.c.l.b16 %v1563
    %v1699 = vunpack.c.l.b16 %v1564
    %v1700 = vunpack.c.l.b16 %v1565
    %v1701 = vunpack.c.l.b16 %v1566
    %v1702 = vunpack.c.l.b16 %v1567
    %v1703 = vunpack.c.l.b16 %v1568
    %v1704 = vunpack.c.l.b16 %v1569
    %v1705 = vunpack.c.l.b16 %v1570
    %v1706 = vunpack.c.l.b16 %v1571
    %v1707 = vunpack.c.l.b16 %v1572
    %v1708 = vunpack.c.l.b16 %v1573
    %v1709 = vunpack.c.l.b16 %v1574
    %v1710 = vunpack.c.l.b16 %v1575
    %v1711 = vunpack.c.l.b16 %v1576
    %v1712 = vunpack.c.l.b16 %v1577
    %v1713 = vunpack.c.l.b16 %v1578
    %v1714 = vunpack.c.l.b16 %v1579
    %v1715 = vunpack.c.l.b16 %v1580
    %v1716 = vunpack.c.l.b16 %v1581
    %v1717 = vunpack.c.l.b16 %v1582
    %v1718 = vunpack.c.l.b16 %v1583
    %v1719 = vunpack.c.l.b16 %v1584
    %v1720 = vunpack.c.l.b16 %v1585
    %v1721 = vunpack.c.l.b16 %v1586
    %v1722 = vunpack.c.l.b16 %v1587
    %v1723 = vunpack.c.l.b16 %v1588
    %v1724 = vunpack.c.l.b16 %v1589
    %v1725 = vunpack.c.l.b16 %v1590
    %v1726 = vunpack.c.l.b16 %v1591
    %v1727 = vunpack.c.l.b16 %v1592
    %v1728 = vunpack.c.l.b16 %v1593
    %v1729 = vunpack.c.l.b16 %v1594
    %v1730 = vunpack.c.l.b16 %v1595
    %v1731 = vunpack.c.l.b16 %v1596
    %v1732 = vunpack.c.l.b16 %v1597
    %v1733 = vunpack.c.l.b16 %v1598
    %v1734 = vunpack.c.l.b16 %v1599
    %v1735 = vunpack.c.l.b16 %v1600
    %v1736 = vunpack.c.l.b16 %v1601
    %v1737 = vunpack.c.l.b16 %v1602
    %v1738 = vunpack.c.l.b16 %v1603
    %v1739 = vunpack.c.l.b16 %v1604
    %v1740 = vunpack.c.l.b16 %v1605
    %v1741 = vunpack.c.l.b16 %v1606
    %v1742 = vunpack.c.l.b16 %v1607
    %v1743 = vunpack.c.l.b16 %v1608
    %v1744 = vunpack.c.l.b16 %v1609
    %v1745 = vunpack.c.l.b16 %v1610
    %v1746 = vunpack.c.l.b16 %v1611
    %v1747 = vunpack.c.l.b16 %v1612
    %v1748 = vunpack.c.l.b16 %v1613
    %v1749 = vunpack.c.l.b16 %v1614
    %v1750 = vunpack.c.l.b16 %v1615
    %v1751 = vunpack.c.l.b16 %v1616
    %v1752 = vpack.c.b16 %v1689, %v1688
    %v1753 = vpack.c.b16 %v1691, %v1690
    %v1754 = vpack.c.b16 %v1693, %v1692
    %v1755 = vpack.c.b16 %v1695, %v1694
    %v1756 = vpack.c.b16 %v1697, %v1696
    %v1757 = vpack.c.b16 %v1699, %v1698
    %v1758 = vpack.c.b16 %v1701, %v1700
    %v1759 = vpack.c.b16 %v1703, %v1702
    %v1760 = vpack.c.b16 %v1705, %v1704
    %v1761 = vpack.c.b16 %v1707, %v1706
    %v1762 = vpack.c.b16 %v1709, %v1708
    %v1763 = vpack.c.b16 %v1711, %v1710
    %v1764 = vpack.c.b16 %v1713, %v1712
    %v1765 = vpack.c.b16 %v1715, %v1714
    %v1766 = vpack.c.b16 %v1717, %v1716
    %v1767 = vpack.c.b16 %v1719, %v1718
    %v1768 = vpack.c.b16 %v1721, %v1720
    %v1769 = vpack.c.b16 %v1723, %v1722
    %v1770 = vpack.c.b16 %v1725, %v1724
    %v1771 = vpack.c.b16 %v1727, %v1726
    %v1772 = vpack.c.b16 %v1729, %v1728
    %v1773 = vpack.c.b16 %v1731, %v1730
    %v1774 = vpack.c.b16 %v1733, %v1732
    %v1775 = vpack.c.b16 %v1735, %v1734
    %v1776 = vpack.c.b16 %v1737, %v1736
    %v1777 = vpack.c.b16 %v1739, %v1738
    %v1778 = vpack.c.b16 %v1741, %v1740
    %v1779 = vpack.c.b16 %v1743, %v1742
    %v1780 = vpack.c.b16 %v1745, %v1744
    %v1781 = vpack.c.b16 %v1747, %v1746
    %v1782 = vpack.c.b16 %v1749, %v1748
    %v1783 = vpack.c.b16 %v1751, %v1750
    %1816 = vmatprep.subr.bf16.mxu0 0
    %1817 = vmatpush1.bf16.msra.mxu0 %v1752
    %1818 = vmatprep.subr.bf16.mxu0 0
    %1819 = vmatpush1.bf16.msra.mxu0 %v1753
    %1820 = vmatprep.subr.bf16.mxu0 0
    %1821 = vmatpush1.bf16.msra.mxu0 %v1754
    %1822 = vmatprep.subr.bf16.mxu0 0
    %1823 = vmatpush1.bf16.msra.mxu0 %v1755
    %1824 = vmatprep.subr.bf16.mxu0 0
    %1825 = vmatpush1.bf16.msra.mxu0 %v1756
    %1826 = vmatprep.subr.bf16.mxu0 0
    %1827 = vmatpush1.bf16.msra.mxu0 %v1757
    %1828 = vmatprep.subr.bf16.mxu0 0
    %1829 = vmatpush1.bf16.msra.mxu0 %v1758
    %1830 = vmatprep.subr.bf16.mxu0 0
    %1831 = vmatpush1.bf16.msra.mxu0 %v1759
    %1832 = vmatprep.subr.bf16.mxu0 0
    %1833 = vmatpush1.bf16.msra.mxu0 %v1760
    %1834 = vmatprep.subr.bf16.mxu0 0
    %1835 = vmatpush1.bf16.msra.mxu0 %v1761
    %1836 = vmatprep.subr.bf16.mxu0 0
    %1837 = vmatpush1.bf16.msra.mxu0 %v1762
    %1838 = vmatprep.subr.bf16.mxu0 0
    %1839 = vmatpush1.bf16.msra.mxu0 %v1763
    %1840 = vmatprep.subr.bf16.mxu0 0
    %1841 = vmatpush1.bf16.msra.mxu0 %v1764
    %1842 = vmatprep.subr.bf16.mxu0 0
    %1843 = vmatpush1.bf16.msra.mxu0 %v1765
    %1844 = vmatprep.subr.bf16.mxu0 0
    %1845 = vmatpush1.bf16.msra.mxu0 %v1766
    %1846 = vmatprep.subr.bf16.mxu0 0
    %1847 = vmatpush1.bf16.msra.mxu0 %v1767
    %1848 = vmatprep.mubr.bf16.mxu0 %v1550
    %1849 = vmatmul.mubr.bf16.gmra.mrb[0].mxu0 %v1549
    %v1850 = vpop.f32.mrb[0].mxu0
    %v1851 = vadd.f32 %v1622, %v1850
    %v1852 = vpop.f32.mrb[0].mxu0
    %v1853 = vpop.f32.mrb[0].mxu0
    %v1854 = vpop.f32.mrb[0].mxu0
    %1855 = vdwg.mxu0
    %1856 = vmatprep.subr.bf16.mxu0 0
    %1857 = vmatpush1.bf16.msra.mxu0 %v1768
    %1858 = vmatprep.subr.bf16.mxu0 0
    %1859 = vmatpush1.bf16.msra.mxu0 %v1769
    %1860 = vmatprep.subr.bf16.mxu0 0
    %1861 = vmatpush1.bf16.msra.mxu0 %v1770
    %1862 = vmatprep.subr.bf16.mxu0 0
    %1863 = vmatpush1.bf16.msra.mxu0 %v1771
    %1864 = vmatprep.subr.bf16.mxu0 0
    %1865 = vmatpush1.bf16.msra.mxu0 %v1772
    %1866 = vmatprep.subr.bf16.mxu0 0
    %1867 = vmatpush1.bf16.msra.mxu0 %v1773
    %1868 = vmatprep.subr.bf16.mxu0 0
    %1869 = vmatpush1.bf16.msra.mxu0 %v1774
    %1870 = vmatprep.subr.bf16.mxu0 0
    %1871 = vmatpush1.bf16.msra.mxu0 %v1775
    %1872 = vmatprep.subr.bf16.mxu0 0
    %1873 = vmatpush1.bf16.msra.mxu0 %v1776
    %1874 = vmatprep.subr.bf16.mxu0 0
    %1875 = vmatpush1.bf16.msra.mxu0 %v1777
    %1876 = vmatprep.subr.bf16.mxu0 0
    %1877 = vmatpush1.bf16.msra.mxu0 %v1778
    %1878 = vmatprep.subr.bf16.mxu0 0
    %1879 = vmatpush1.bf16.msra.mxu0 %v1779
    %1880 = vmatprep.subr.bf16.mxu0 0
    %1881 = vmatpush1.bf16.msra.mxu0 %v1780
    %1882 = vmatprep.subr.bf16.mxu0 0
    %1883 = vmatpush1.bf16.msra.mxu0 %v1781
    %1884 = vmatprep.subr.bf16.mxu0 0
    %1885 = vmatpush1.bf16.msra.mxu0 %v1782
    %1886 = vmatprep.subr.bf16.mxu0 0
    %1887 = vmatpush1.bf16.msra.mxu0 %v1783
    %1888 = vmatprep.mubr.bf16.mxu0 %v1552
    %1889 = vmatmul.mubr.bf16.gmra.mrb[0].mxu0 %v1551
    %v1890 = vpop.f32.mrb[0].mxu0
    %v1891 = vadd.f32 %v1851, %v1890
    %v1892 = vpop.f32.mrb[0].mxu0
    %v1893 = vpop.f32.mrb[0].mxu0
    %v1894 = vpop.f32.mrb[0].mxu0
    %1895 = vdwg.mxu0
    %v1896 = vxor.u32 %v1891, 2147483648
    %v1897 = vmul.f32 %v1896, 1.442695
    %v1898 = vpow.pop %v1897
    %v1899 = vadd.f32 %v1898, 1.0
    %v1900 = vrcp.pop %v1899
    %v1901 = vmul.f32 1.0, %v1900
    %v1902 = vpack.c.bf16 %v1901, %v1901
    %1903 = vst [vmem:[%s7] sm:$0xf] %v1902
    // Predicated region
    $region50: #{discriminator_forward.1} parent=1 // pred_check
      _
    $region51: #{discriminator_forward.1} parent=1 // pred_check_branch
      %1905 = sbr.rel (0) target = $region53
    $region52: #{discriminator_forward.1} parent=1 // pred_region
      _
    $region53: #{discriminator_forward.1} parent=1 // pred_fallthru
      _
    // Predicated region
    $region54: #{discriminator_forward.1} parent=1 // pred_check
      _
    $region55: #{discriminator_forward.1} parent=1 // pred_check_branch
      %1907 = sbr.rel (0) target = $region57
    $region56: #{discriminator_forward.1} parent=1 // pred_region
      _
    $region57: #{discriminator_forward.1} parent=1 // pred_fallthru
      _
    %1908 = vsyncpa [#allocation3], 1
    %1909 = vsyncpa [#allocation5], 1
    %1910 = vsyncpa [#allocation8], 1

</llo_original>
